<compile_context>
chip_gen: v7x
topology: tpu7x:2x2x1
jax: 0.10.0
libtpu: 0.0.40
codegen_flags: <defaults>
</compile_context>

<pallas_src>
import functools

import jax
import jax.numpy as jnp
from jax.experimental import pallas as pl
from jax.experimental.pallas import tpu as pltpu


def _round_up(x, m):
    return (x + m - 1) // m * m


def _mlp_kernel(x_ref,
                w1_ref, b1_ref,
                w2_ref, b2_ref,
                w3_ref, b3_ref,
                w4_ref, b4_ref,
                o_ref):
    """Whole forward pass for one batch tile, entirely in VMEM.

    bf16 operands feed the MXU with f32 accumulation; bias/ReLU run on the
    VPU in f32; sigmoid uses the EUP. Output block is 128-lane dense.
    """
    h = x_ref[...]                                   # bf16 [tile, D0_pad]

    h = jnp.dot(h, w1_ref[...], preferred_element_type=jnp.float32) + b1_ref[...]
    h = jnp.maximum(h, 0.0).astype(jnp.bfloat16)

    h = jnp.dot(h, w2_ref[...], preferred_element_type=jnp.float32) + b2_ref[...]
    h = jnp.maximum(h, 0.0).astype(jnp.bfloat16)

    h = jnp.dot(h, w3_ref[...], preferred_element_type=jnp.float32) + b3_ref[...]
    h = jnp.maximum(h, 0.0).astype(jnp.bfloat16)

    z = jnp.dot(h, w4_ref[...], preferred_element_type=jnp.float32) + b4_ref[...]
    o_ref[...] = jax.nn.sigmoid(z).astype(o_ref.dtype)


def _pad_and_cast_params(params):
    """Zero-pad every layer's in/out dims to multiples of 128.

    Weights -> bf16 (MXU operands), biases -> f32 row vectors (1, D_out_pad).
    Zero padding keeps the math exact: padded hidden units see zero weight and
    zero bias, so they stay zero through ReLU and contribute nothing downstream.
    """
    padded = []
    for (w, b) in params:
        din, dout = w.shape
        din_p, dout_p = _round_up(din, 128), _round_up(dout, 128)
        wp = jnp.zeros((din_p, dout_p), jnp.bfloat16)
        wp = wp.at[:din, :dout].set(w.astype(jnp.bfloat16))
        bp = jnp.zeros((1, dout_p), jnp.float32)
        bp = bp.at[0, :dout].set(b.astype(jnp.float32))
        padded.append((wp, bp))
    return padded


def deep_forward(x, params, *, batch_tile=256):
    """params = [(W1,b1), ..., (W4,b4)] with W: [D_in, D_out] (already transposed
    from PyTorch's [out, in]), b: [D_out]. Returns sigmoid(MLP(x)) in f32."""
    B, D0 = x.shape
    d_out = params[-1][0].shape[1]

    (w1, b1), (w2, b2), (w3, b3), (w4, b4) = _pad_and_cast_params(params)
    d0_p = w1.shape[0]
    dout_p = w4.shape[1]

    # Batch tile: multiple of 128 (MXU/sublane friendly), no bigger than the
    # (rounded) batch so small batches don't over-pad.
    tile = min(_round_up(batch_tile, 128), _round_up(B, 128))
    B_p = _round_up(B, tile)
    grid = (B_p // tile,)

    # Pad batch & feature dims; cast activations to bf16 for the MXU.
    xp = jnp.zeros((B_p, d0_p), jnp.bfloat16)
    xp = xp.at[:B, :D0].set(x.astype(jnp.bfloat16))

    def const_spec(arr):
        # Full-array block, constant index -> resident across the whole grid.
        return pl.BlockSpec(arr.shape, lambda i: (0, 0))

    in_specs = [
        pl.BlockSpec((tile, d0_p), lambda i: (i, 0)),
        const_spec(w1), const_spec(b1),
        const_spec(w2), const_spec(b2),
        const_spec(w3), const_spec(b3),
        const_spec(w4), const_spec(b4),
    ]
    out_spec = pl.BlockSpec((tile, dout_p), lambda i: (i, 0))

    # Rough VMEM budget: double-buffered x (bf16) + out (f32), double-buffered
    # weights, plus a few f32 intermediate activation slabs. Only raise the
    # scoped limit when the default (32 MiB) would not cover it.
    weight_bytes = sum(w.size * 2 + b.size * 4 for (w, b) in
                       [(w1, b1), (w2, b2), (w3, b3), (w4, b4)])
    max_hidden = max(w.shape[1] for (w, _) in [(w1, b1), (w2, b2), (w3, b3), (w4, b4)])
    est = (2 * (tile * d0_p * 2 + tile * dout_p * 4)
           + 2 * weight_bytes
           + 4 * tile * max_hidden * 4)
    vmem_limit = None
    if est > (32 << 20):
        vmem_limit = min(est + (4 << 20), 100 << 20)

    out_padded = pl.pallas_call(
        _mlp_kernel,
        out_shape=jax.ShapeDtypeStruct((B_p, dout_p), jnp.float32),
        grid_spec=pltpu.PrefetchScalarGridSpec(
            num_scalar_prefetch=0,
            grid=grid,
            in_specs=in_specs,
            out_specs=out_spec,
        ),
        compiler_params=pltpu.CompilerParams(
            dimension_semantics=("parallel",),
            vmem_limit_bytes=vmem_limit),
    )(xp, w1, b1, w2, b2, w3, b3, w4, b4)

    return out_padded[:B, :d_out]


def init_deep_params(key, layers):
    """Deterministic init mirroring nn.Linear (U(-1/sqrt(fan_in), +...)).

    PyTorch Linear weight is [out, in]; we store transposed [in, out]."""
    params = []
    for i in range(len(layers) - 1):
        fan_in, fan_out = layers[i], layers[i + 1]
        key, kw, kb = jax.random.split(key, 3)
        bound = 1.0 / jnp.sqrt(fan_in)
        w = jax.random.uniform(kw, (fan_in, fan_out), jnp.float32, -bound, bound)
        b = jax.random.uniform(kb, (fan_out,), jnp.float32, -bound, bound)
        params.append((w, b))
    return params


def deep_forward_ref(x, params):
    """Plain-JAX reference mirroring the kernel's bf16-operand / f32-accum math."""
    h = x.astype(jnp.bfloat16)
    for (w, b) in params[:-1]:
        z = jnp.dot(h.astype(jnp.float32),
                    w.astype(jnp.bfloat16).astype(jnp.float32)) + b[None, :]
        h = jnp.maximum(z, 0.0).astype(jnp.bfloat16)
    w, b = params[-1]
    z = jnp.dot(h.astype(jnp.float32),
                w.astype(jnp.bfloat16).astype(jnp.float32)) + b[None, :]
    return jax.nn.sigmoid(z)


if __name__ == "__main__":
    # Small shapes consistent with the module structure (4 Linear layers,
    # ReLU between the first three, sigmoid at the end). Batch = 512 so the
    # default 256-row tile gives a 2-step parallel grid (both v7x cores busy).
    layers = [128, 256, 256, 64, 16]
    batch = 512

    key = jax.random.PRNGKey(0)
    key, kx = jax.random.split(key)
    x = jax.random.normal(kx, (batch, layers[0]), jnp.float32)
    params = init_deep_params(key, layers)

    run = jax.jit(functools.partial(deep_forward, batch_tile=256))
    out = jax.block_until_ready(run(x, params))

    ref = deep_forward_ref(x, params)
    assert out.shape == (batch, layers[-1])
    assert jnp.allclose(out, ref, atol=1e-2, rtol=1e-2), "mismatch vs reference"

    print("KERNEL_OK")
</pallas_src>

<mosaic_0001>
module attributes {stable_mosaic.version = 11 : i64} {
  func.func @_mlp_kernel(%arg0: i32, %arg1: memref<256x128xbf16, #tpu.memory_space<vmem>>, %arg2: memref<128x256xbf16, #tpu.memory_space<vmem>>, %arg3: memref<1x256xf32, #tpu.memory_space<vmem>>, %arg4: memref<256x256xbf16, #tpu.memory_space<vmem>>, %arg5: memref<1x256xf32, #tpu.memory_space<vmem>>, %arg6: memref<256x128xbf16, #tpu.memory_space<vmem>>, %arg7: memref<1x128xf32, #tpu.memory_space<vmem>>, %arg8: memref<128x128xbf16, #tpu.memory_space<vmem>>, %arg9: memref<1x128xf32, #tpu.memory_space<vmem>>, %arg10: memref<256x128xf32, #tpu.memory_space<vmem>>) attributes {dimension_semantics = [#tpu.dimension_semantics<parallel>], iteration_bounds = array<i64: 2>, scalar_prefetch = 0 : i64, scratch_operands = 0 : i64, tpu.core_type = #tpu.core_type<tc>, window_params = [{transform_indices = @transform_0, window_bounds = array<i64: 256, 128>}, {pipeline_mode = #tpu.pipeline_mode<synchronous>, transform_indices = @transform_1, window_bounds = array<i64: 128, 256>}, {pipeline_mode = #tpu.pipeline_mode<synchronous>, transform_indices = @transform_2, window_bounds = array<i64: 1, 256>}, {pipeline_mode = #tpu.pipeline_mode<synchronous>, transform_indices = @transform_3, window_bounds = array<i64: 256, 256>}, {pipeline_mode = #tpu.pipeline_mode<synchronous>, transform_indices = @transform_4, window_bounds = array<i64: 1, 256>}, {pipeline_mode = #tpu.pipeline_mode<synchronous>, transform_indices = @transform_5, window_bounds = array<i64: 256, 128>}, {pipeline_mode = #tpu.pipeline_mode<synchronous>, transform_indices = @transform_6, window_bounds = array<i64: 1, 128>}, {pipeline_mode = #tpu.pipeline_mode<synchronous>, transform_indices = @transform_7, window_bounds = array<i64: 128, 128>}, {pipeline_mode = #tpu.pipeline_mode<synchronous>, transform_indices = @transform_8, window_bounds = array<i64: 1, 128>}, {transform_indices = @transform_9, window_bounds = array<i64: 256, 128>}]} {
    %c0 = arith.constant 0 : index
    %c0_0 = arith.constant 0 : index
    %0 = vector.load %arg1[%c0, %c0_0] : memref<256x128xbf16, #tpu.memory_space<vmem>>, vector<256x128xbf16>
    %c0_1 = arith.constant 0 : index
    %c0_2 = arith.constant 0 : index
    %1 = vector.load %arg2[%c0_1, %c0_2] : memref<128x256xbf16, #tpu.memory_space<vmem>>, vector<128x256xbf16>
    %cst = arith.constant dense<0.000000e+00> : vector<256x256xf32>
    %2 = tpu.matmul %0, %1, %cst {dimension_numbers = #tpu.dot_dimension_numbers<[1], [0], [0], [1], [0, 0, 1, 1], [], []>} : vector<256x128xbf16>, vector<128x256xbf16>, vector<256x256xf32> -> vector<256x256xf32>
    %c0_3 = arith.constant 0 : index
    %c0_4 = arith.constant 0 : index
    %3 = vector.load %arg3[%c0_3, %c0_4] : memref<1x256xf32, #tpu.memory_space<vmem>>, vector<1x256xf32>
    %4 = vector.broadcast %3 : vector<1x256xf32> to vector<256x256xf32>
    %5 = arith.addf %2, %4 : vector<256x256xf32>
    %cst_5 = arith.constant 0.000000e+00 : f32
    %6 = vector.broadcast %cst_5 : f32 to vector<256x256xf32>
    %7 = arith.maximumf %5, %6 : vector<256x256xf32>
    %8 = arith.truncf %7 : vector<256x256xf32> to vector<256x256xbf16>
    %c0_6 = arith.constant 0 : index
    %c0_7 = arith.constant 0 : index
    %9 = vector.load %arg4[%c0_6, %c0_7] : memref<256x256xbf16, #tpu.memory_space<vmem>>, vector<256x256xbf16>
    %cst_8 = arith.constant dense<0.000000e+00> : vector<256x256xf32>
    %10 = tpu.matmul %8, %9, %cst_8 {dimension_numbers = #tpu.dot_dimension_numbers<[1], [0], [0], [1], [0, 0, 1, 1], [], []>} : vector<256x256xbf16>, vector<256x256xbf16>, vector<256x256xf32> -> vector<256x256xf32>
    %c0_9 = arith.constant 0 : index
    %c0_10 = arith.constant 0 : index
    %11 = vector.load %arg5[%c0_9, %c0_10] : memref<1x256xf32, #tpu.memory_space<vmem>>, vector<1x256xf32>
    %12 = vector.broadcast %11 : vector<1x256xf32> to vector<256x256xf32>
    %13 = arith.addf %10, %12 : vector<256x256xf32>
    %cst_11 = arith.constant 0.000000e+00 : f32
    %14 = vector.broadcast %cst_11 : f32 to vector<256x256xf32>
    %15 = arith.maximumf %13, %14 : vector<256x256xf32>
    %16 = arith.truncf %15 : vector<256x256xf32> to vector<256x256xbf16>
    %c0_12 = arith.constant 0 : index
    %c0_13 = arith.constant 0 : index
    %17 = vector.load %arg6[%c0_12, %c0_13] : memref<256x128xbf16, #tpu.memory_space<vmem>>, vector<256x128xbf16>
    %cst_14 = arith.constant dense<0.000000e+00> : vector<256x128xf32>
    %18 = tpu.matmul %16, %17, %cst_14 {dimension_numbers = #tpu.dot_dimension_numbers<[1], [0], [0], [1], [0, 0, 1, 1], [], []>} : vector<256x256xbf16>, vector<256x128xbf16>, vector<256x128xf32> -> vector<256x128xf32>
    %c0_15 = arith.constant 0 : index
    %c0_16 = arith.constant 0 : index
    %19 = vector.load %arg7[%c0_15, %c0_16] : memref<1x128xf32, #tpu.memory_space<vmem>>, vector<1x128xf32>
    %20 = vector.broadcast %19 : vector<1x128xf32> to vector<256x128xf32>
    %21 = arith.addf %18, %20 : vector<256x128xf32>
    %cst_17 = arith.constant 0.000000e+00 : f32
    %22 = vector.broadcast %cst_17 : f32 to vector<256x128xf32>
    %23 = arith.maximumf %21, %22 : vector<256x128xf32>
    %24 = arith.truncf %23 : vector<256x128xf32> to vector<256x128xbf16>
    %c0_18 = arith.constant 0 : index
    %c0_19 = arith.constant 0 : index
    %25 = vector.load %arg8[%c0_18, %c0_19] : memref<128x128xbf16, #tpu.memory_space<vmem>>, vector<128x128xbf16>
    %cst_20 = arith.constant dense<0.000000e+00> : vector<256x128xf32>
    %26 = tpu.matmul %24, %25, %cst_20 {dimension_numbers = #tpu.dot_dimension_numbers<[1], [0], [0], [1], [0, 0, 1, 1], [], []>} : vector<256x128xbf16>, vector<128x128xbf16>, vector<256x128xf32> -> vector<256x128xf32>
    %c0_21 = arith.constant 0 : index
    %c0_22 = arith.constant 0 : index
    %27 = vector.load %arg9[%c0_21, %c0_22] : memref<1x128xf32, #tpu.memory_space<vmem>>, vector<1x128xf32>
    %28 = vector.broadcast %27 : vector<1x128xf32> to vector<256x128xf32>
    %29 = arith.addf %26, %28 : vector<256x128xf32>
    %30 = arith.negf %29 : vector<256x128xf32>
    %31 = math.exp %30 : vector<256x128xf32>
    %cst_23 = arith.constant 1.000000e+00 : f32
    %32 = vector.broadcast %cst_23 : f32 to vector<256x128xf32>
    %33 = arith.addf %32, %31 : vector<256x128xf32>
    %34 = arith.divf %32, %33 : vector<256x128xf32>
    %c0_24 = arith.constant 0 : index
    %c0_25 = arith.constant 0 : index
    %35 = vector.load %arg10[%c0_24, %c0_25] : memref<256x128xf32, #tpu.memory_space<vmem>>, vector<256x128xf32>
    tpu.vector_store %arg10[%c0_24, %c0_25], %34 {strides = array<i32>} : memref<256x128xf32, #tpu.memory_space<vmem>>, vector<256x128xf32>,
    return
  }
  func.func @transform_0(%arg0: i32) -> (i32, i32) {
    %c0_i32 = arith.constant 0 : i32
    %c0_i32_0 = arith.constant 0 : i32
    return %arg0, %c0_i32 : i32, i32
  }
  func.func @transform_1(%arg0: i32) -> (i32, i32) {
    %c0_i32 = arith.constant 0 : i32
    %c0_i32_0 = arith.constant 0 : i32
    %c0_i32_1 = arith.constant 0 : i32
    return %c0_i32, %c0_i32_0 : i32, i32
  }
  func.func @transform_2(%arg0: i32) -> (i32, i32) {
    %c0_i32 = arith.constant 0 : i32
    %c0_i32_0 = arith.constant 0 : i32
    %c0_i32_1 = arith.constant 0 : i32
    return %c0_i32, %c0_i32_0 : i32, i32
  }
  func.func @transform_3(%arg0: i32) -> (i32, i32) {
    %c0_i32 = arith.constant 0 : i32
    %c0_i32_0 = arith.constant 0 : i32
    %c0_i32_1 = arith.constant 0 : i32
    return %c0_i32, %c0_i32_0 : i32, i32
  }
  func.func @transform_4(%arg0: i32) -> (i32, i32) {
    %c0_i32 = arith.constant 0 : i32
    %c0_i32_0 = arith.constant 0 : i32
    %c0_i32_1 = arith.constant 0 : i32
    return %c0_i32, %c0_i32_0 : i32, i32
  }
  func.func @transform_5(%arg0: i32) -> (i32, i32) {
    %c0_i32 = arith.constant 0 : i32
    %c0_i32_0 = arith.constant 0 : i32
    %c0_i32_1 = arith.constant 0 : i32
    return %c0_i32, %c0_i32_0 : i32, i32
  }
  func.func @transform_6(%arg0: i32) -> (i32, i32) {
    %c0_i32 = arith.constant 0 : i32
    %c0_i32_0 = arith.constant 0 : i32
    %c0_i32_1 = arith.constant 0 : i32
    return %c0_i32, %c0_i32_0 : i32, i32
  }
  func.func @transform_7(%arg0: i32) -> (i32, i32) {
    %c0_i32 = arith.constant 0 : i32
    %c0_i32_0 = arith.constant 0 : i32
    %c0_i32_1 = arith.constant 0 : i32
    return %c0_i32, %c0_i32_0 : i32, i32
  }
  func.func @transform_8(%arg0: i32) -> (i32, i32) {
    %c0_i32 = arith.constant 0 : i32
    %c0_i32_0 = arith.constant 0 : i32
    %c0_i32_1 = arith.constant 0 : i32
    return %c0_i32, %c0_i32_0 : i32, i32
  }
  func.func @transform_9(%arg0: i32) -> (i32, i32) {
    %c0_i32 = arith.constant 0 : i32
    %c0_i32_0 = arith.constant 0 : i32
    return %arg0, %c0_i32 : i32, i32
  }
}

</mosaic_0001>

<llo_original>
// kernel: deep_forward.1
$region0: #{deep_forward.1}
  #allocation0 [shape = 'u32[]', space=smem, size = 0x4, offset = 0x4, fixed_abs, tag = 'smem constant byte address 0x4 - core index']
  #allocation1 [shape = 'u32[144,128]{1,0:T(1,128)}', space=vmem, size = 0x12000, scoped, tag = 'internal scratch']
  %s0 = inlined_call_operand.vmem [shape: bf16[512,128], index: 0, kind: input, shape index: {}]
  %s1 = inlined_call_operand.vmem [shape: bf16[128,256], index: 1, kind: input, shape index: {}]
  %s2 = inlined_call_operand.vmem [shape: f32[1,256], index: 2, kind: input, shape index: {}]
  %s3 = inlined_call_operand.vmem [shape: bf16[256,256], index: 3, kind: input, shape index: {}]
  %s4 = inlined_call_operand.vmem [shape: f32[1,256], index: 4, kind: input, shape index: {}]
  %s5 = inlined_call_operand.vmem [shape: bf16[256,128], index: 5, kind: input, shape index: {}]
  %s6 = inlined_call_operand.vmem [shape: f32[1,128], index: 6, kind: input, shape index: {}]
  %s7 = inlined_call_operand.vmem [shape: bf16[128,128], index: 7, kind: input, shape index: {}]
  %s8 = inlined_call_operand.vmem [shape: f32[1,128], index: 8, kind: input, shape index: {}]
  %s9 = inlined_call_operand.vmem [shape: f32[512,128], index: 9, kind: output, shape index: {}]
  %s10 = sld [smem:[#allocation0]]
  $region69: #{deep_forward.1} parent=0
    _
  %s12 = ssub.s32 1, %s10
  %s13 = scalar_select 0, %s12, %s10
  loop: start=0, step=1, limit=4
  $region2: #{deep_forward.1} parent=0 // loop_pre_header
    _
  $region3: #{deep_forward.1} parent=0 // loop_header
    %s15 = sphi 0, %s19
    %p16 = scmp.ge.s32.totalorder %s15, 4
    %s25 = sphi 0, %s27
    %s28 = sphi 0, %s25
    %s29 = sphi 0, %s28
    %s45 = sphi 0, %s29
    %s49 = sphi 0, %s49
    %s51 = sphi 0, %s49
    %s52 = sphi 0, %s51
    %s66 = sphi 0, %s52
    %s70 = sphi 0, %s70
    %s72 = sphi 0, %s70
    %s73 = sphi 0, %s72
    %s87 = sphi 0, %s73
    %s91 = sphi 0, %s91
    %s93 = sphi 0, %s91
    %s94 = sphi 0, %s93
    %s108 = sphi 0, %s94
    %s112 = sphi 0, %s112
    %s114 = sphi 0, %s112
    %s115 = sphi 0, %s114
    %s129 = sphi 0, %s115
    %s133 = sphi 0, %s133
    %s135 = sphi 0, %s133
    %s136 = sphi 0, %s135
    %s150 = sphi 0, %s136
    %s154 = sphi 0, %s154
    %s156 = sphi 0, %s154
    %s157 = sphi 0, %s156
    %s171 = sphi 0, %s157
    %s175 = sphi 0, %s175
    %s177 = sphi 0, %s175
    %s178 = sphi 0, %s177
    %s192 = sphi 0, %s178
    %s196 = sphi 0, %s196
    %s198 = sphi 0, %s196
    %s199 = sphi 0, %s198
    %s213 = sphi 0, %s199
    %s219 = sphi 0, %s221
    %s222 = sphi 0, %s219
    %s223 = sphi 0, %s222
    %s239 = sphi 0, %s223
  $region4: #{deep_forward.1} parent=0 // loop_header_branch
    %18 = sbr.rel (%p16) target = $region8
  $region5: #{deep_forward.1} parent=0 // loop_body
    %s20 = ssub.s32 %s15, 1
    %s21 = ssub.s32 %s15, 2
    %s22 = sadd.s32 %s15, 1
    %s23 = ssub.s32 %s15, %s22
    %p24 = scmp.eq.s32.totalorder %s23, 0
    %s26 = sadd.s32 %s25, 1
    %s27 = scalar_select %p24, %s25, %s26
    %p30 = pneg %p24
    %p31 = scmp.eq.s32.totalorder %s15, 1
    %p32 = por %p30, %p31
    %p33 = scmp.ne.s32.totalorder %s25, %s28
    %p34 = scmp.eq.s32.totalorder %s15, 0
    %p35 = por %p33, %p34
    %p36 = scmp.ne.s32.totalorder %s25, %s28
    %p37 = scmp.eq.s32.totalorder %s20, 1
    %p38 = por %p36, %p37
    %p39 = scmp.ne.s32.totalorder %s28, %s29
    %p40 = scmp.eq.s32.totalorder %s20, 0
    %p41 = por %p39, %p40
    %p42 = scmp.ne.s32.totalorder %s28, %s29
    %p43 = scmp.eq.s32.totalorder %s21, 1
    %p44 = por %p42, %p43
    %p46 = scmp.ne.s32.totalorder %s29, %s45
    %p47 = scmp.eq.s32.totalorder %s21, 0
    %p48 = por %p46, %p47
    %s50 = sadd.s32 %s49, 1
    %p53 = scmp.eq.s32.totalorder %s15, 1
    %p54 = scmp.ne.s32.totalorder %s49, %s51
    %p55 = scmp.eq.s32.totalorder %s15, 0
    %p56 = por %p54, %p55
    %p57 = scmp.ne.s32.totalorder %s49, %s51
    %p58 = scmp.eq.s32.totalorder %s20, 1
    %p59 = por %p57, %p58
    %p60 = scmp.ne.s32.totalorder %s51, %s52
    %p61 = scmp.eq.s32.totalorder %s20, 0
    %p62 = por %p60, %p61
    %p63 = scmp.ne.s32.totalorder %s51, %s52
    %p64 = scmp.eq.s32.totalorder %s21, 1
    %p65 = por %p63, %p64
    %p67 = scmp.ne.s32.totalorder %s52, %s66
    %p68 = scmp.eq.s32.totalorder %s21, 0
    %p69 = por %p67, %p68
    %s71 = sadd.s32 %s70, 1
    %p74 = scmp.eq.s32.totalorder %s15, 1
    %p75 = scmp.ne.s32.totalorder %s70, %s72
    %p76 = scmp.eq.s32.totalorder %s15, 0
    %p77 = por %p75, %p76
    %p78 = scmp.ne.s32.totalorder %s70, %s72
    %p79 = scmp.eq.s32.totalorder %s20, 1
    %p80 = por %p78, %p79
    %p81 = scmp.ne.s32.totalorder %s72, %s73
    %p82 = scmp.eq.s32.totalorder %s20, 0
    %p83 = por %p81, %p82
    %p84 = scmp.ne.s32.totalorder %s72, %s73
    %p85 = scmp.eq.s32.totalorder %s21, 1
    %p86 = por %p84, %p85
    %p88 = scmp.ne.s32.totalorder %s73, %s87
    %p89 = scmp.eq.s32.totalorder %s21, 0
    %p90 = por %p88, %p89
    %s92 = sadd.s32 %s91, 1
    %p95 = scmp.eq.s32.totalorder %s15, 1
    %p96 = scmp.ne.s32.totalorder %s91, %s93
    %p97 = scmp.eq.s32.totalorder %s15, 0
    %p98 = por %p96, %p97
    %p99 = scmp.ne.s32.totalorder %s91, %s93
    %p100 = scmp.eq.s32.totalorder %s20, 1
    %p101 = por %p99, %p100
    %p102 = scmp.ne.s32.totalorder %s93, %s94
    %p103 = scmp.eq.s32.totalorder %s20, 0
    %p104 = por %p102, %p103
    %p105 = scmp.ne.s32.totalorder %s93, %s94
    %p106 = scmp.eq.s32.totalorder %s21, 1
    %p107 = por %p105, %p106
    %p109 = scmp.ne.s32.totalorder %s94, %s108
    %p110 = scmp.eq.s32.totalorder %s21, 0
    %p111 = por %p109, %p110
    %s113 = sadd.s32 %s112, 1
    %p116 = scmp.eq.s32.totalorder %s15, 1
    %p117 = scmp.ne.s32.totalorder %s112, %s114
    %p118 = scmp.eq.s32.totalorder %s15, 0
    %p119 = por %p117, %p118
    %p120 = scmp.ne.s32.totalorder %s112, %s114
    %p121 = scmp.eq.s32.totalorder %s20, 1
    %p122 = por %p120, %p121
    %p123 = scmp.ne.s32.totalorder %s114, %s115
    %p124 = scmp.eq.s32.totalorder %s20, 0
    %p125 = por %p123, %p124
    %p126 = scmp.ne.s32.totalorder %s114, %s115
    %p127 = scmp.eq.s32.totalorder %s21, 1
    %p128 = por %p126, %p127
    %p130 = scmp.ne.s32.totalorder %s115, %s129
    %p131 = scmp.eq.s32.totalorder %s21, 0
    %p132 = por %p130, %p131
    %s134 = sadd.s32 %s133, 1
    %p137 = scmp.eq.s32.totalorder %s15, 1
    %p138 = scmp.ne.s32.totalorder %s133, %s135
    %p139 = scmp.eq.s32.totalorder %s15, 0
    %p140 = por %p138, %p139
    %p141 = scmp.ne.s32.totalorder %s133, %s135
    %p142 = scmp.eq.s32.totalorder %s20, 1
    %p143 = por %p141, %p142
    %p144 = scmp.ne.s32.totalorder %s135, %s136
    %p145 = scmp.eq.s32.totalorder %s20, 0
    %p146 = por %p144, %p145
    %p147 = scmp.ne.s32.totalorder %s135, %s136
    %p148 = scmp.eq.s32.totalorder %s21, 1
    %p149 = por %p147, %p148
    %p151 = scmp.ne.s32.totalorder %s136, %s150
    %p152 = scmp.eq.s32.totalorder %s21, 0
    %p153 = por %p151, %p152
    %s155 = sadd.s32 %s154, 1
    %p158 = scmp.eq.s32.totalorder %s15, 1
    %p159 = scmp.ne.s32.totalorder %s154, %s156
    %p160 = scmp.eq.s32.totalorder %s15, 0
    %p161 = por %p159, %p160
    %p162 = scmp.ne.s32.totalorder %s154, %s156
    %p163 = scmp.eq.s32.totalorder %s20, 1
    %p164 = por %p162, %p163
    %p165 = scmp.ne.s32.totalorder %s156, %s157
    %p166 = scmp.eq.s32.totalorder %s20, 0
    %p167 = por %p165, %p166
    %p168 = scmp.ne.s32.totalorder %s156, %s157
    %p169 = scmp.eq.s32.totalorder %s21, 1
    %p170 = por %p168, %p169
    %p172 = scmp.ne.s32.totalorder %s157, %s171
    %p173 = scmp.eq.s32.totalorder %s21, 0
    %p174 = por %p172, %p173
    %s176 = sadd.s32 %s175, 1
    %p179 = scmp.eq.s32.totalorder %s15, 1
    %p180 = scmp.ne.s32.totalorder %s175, %s177
    %p181 = scmp.eq.s32.totalorder %s15, 0
    %p182 = por %p180, %p181
    %p183 = scmp.ne.s32.totalorder %s175, %s177
    %p184 = scmp.eq.s32.totalorder %s20, 1
    %p185 = por %p183, %p184
    %p186 = scmp.ne.s32.totalorder %s177, %s178
    %p187 = scmp.eq.s32.totalorder %s20, 0
    %p188 = por %p186, %p187
    %p189 = scmp.ne.s32.totalorder %s177, %s178
    %p190 = scmp.eq.s32.totalorder %s21, 1
    %p191 = por %p189, %p190
    %p193 = scmp.ne.s32.totalorder %s178, %s192
    %p194 = scmp.eq.s32.totalorder %s21, 0
    %p195 = por %p193, %p194
    %s197 = sadd.s32 %s196, 1
    %p200 = scmp.eq.s32.totalorder %s15, 1
    %p201 = scmp.ne.s32.totalorder %s196, %s198
    %p202 = scmp.eq.s32.totalorder %s15, 0
    %p203 = por %p201, %p202
    %p204 = scmp.ne.s32.totalorder %s196, %s198
    %p205 = scmp.eq.s32.totalorder %s20, 1
    %p206 = por %p204, %p205
    %p207 = scmp.ne.s32.totalorder %s198, %s199
    %p208 = scmp.eq.s32.totalorder %s20, 0
    %p209 = por %p207, %p208
    %p210 = scmp.ne.s32.totalorder %s198, %s199
    %p211 = scmp.eq.s32.totalorder %s21, 1
    %p212 = por %p210, %p211
    %p214 = scmp.ne.s32.totalorder %s199, %s213
    %p215 = scmp.eq.s32.totalorder %s21, 0
    %p216 = por %p214, %p215
    %s217 = ssub.s32 %s15, %s22
    %p218 = scmp.eq.s32.totalorder %s217, 0
    %s220 = sadd.s32 %s219, 1
    %s221 = scalar_select %p218, %s219, %s220
    %p224 = pneg %p218
    %p225 = scmp.eq.s32.totalorder %s15, 1
    %p226 = por %p224, %p225
    %p227 = scmp.ne.s32.totalorder %s219, %s222
    %p228 = scmp.eq.s32.totalorder %s15, 0
    %p229 = por %p227, %p228
    %p230 = scmp.ne.s32.totalorder %s219, %s222
    %p231 = scmp.eq.s32.totalorder %s20, 1
    %p232 = por %p230, %p231
    %p233 = scmp.ne.s32.totalorder %s222, %s223
    %p234 = scmp.eq.s32.totalorder %s20, 0
    %p235 = por %p233, %p234
    %p236 = scmp.ne.s32.totalorder %s222, %s223
    %p237 = scmp.eq.s32.totalorder %s21, 1
    %p238 = por %p236, %p237
    %p240 = scmp.ne.s32.totalorder %s223, %s239
    %p241 = scmp.eq.s32.totalorder %s21, 0
    %p242 = por %p240, %p241
    %p243 = scmp.le.s32.totalorder 1, %s15
    %p244 = scmp.lt.s32.totalorder %s15, 3
    %p245 = pnand %p243, %p244
    %p246 = pneg %p245
    // Predicated region
    $region9: #{deep_forward.1} parent=5 // pred_check
      _
    $region10: #{deep_forward.1} parent=5 // pred_check_branch
      %248 = sbr.rel (%p245) target = $region12
    $region11: #{deep_forward.1} parent=5 // pred_region
      %s249 = ssub.s32 %s15, 1
      // Predicated region
      $region13: #{deep_forward.1} parent=11 // pred_check
        %p250 = pneg %p62
      $region14: #{deep_forward.1} parent=11 // pred_check_branch
        %252 = sbr.rel (%p250) target = $region16
      $region15: #{deep_forward.1} parent=11 // pred_region
        _
      $region16: #{deep_forward.1} parent=11 // pred_fallthru
        _
      // Predicated region
      $region17: #{deep_forward.1} parent=11 // pred_check
        %p253 = pneg %p83
      $region18: #{deep_forward.1} parent=11 // pred_check_branch
        %255 = sbr.rel (%p253) target = $region20
      $region19: #{deep_forward.1} parent=11 // pred_region
        _
      $region20: #{deep_forward.1} parent=11 // pred_fallthru
        _
      // Predicated region
      $region21: #{deep_forward.1} parent=11 // pred_check
        %p256 = pneg %p104
      $region22: #{deep_forward.1} parent=11 // pred_check_branch
        %258 = sbr.rel (%p256) target = $region24
      $region23: #{deep_forward.1} parent=11 // pred_region
        _
      $region24: #{deep_forward.1} parent=11 // pred_fallthru
        _
      // Predicated region
      $region25: #{deep_forward.1} parent=11 // pred_check
        %p259 = pneg %p125
      $region26: #{deep_forward.1} parent=11 // pred_check_branch
        %261 = sbr.rel (%p259) target = $region28
      $region27: #{deep_forward.1} parent=11 // pred_region
        _
      $region28: #{deep_forward.1} parent=11 // pred_fallthru
        _
      // Predicated region
      $region29: #{deep_forward.1} parent=11 // pred_check
        %p262 = pneg %p146
      $region30: #{deep_forward.1} parent=11 // pred_check_branch
        %264 = sbr.rel (%p262) target = $region32
      $region31: #{deep_forward.1} parent=11 // pred_region
        _
      $region32: #{deep_forward.1} parent=11 // pred_fallthru
        _
      // Predicated region
      $region33: #{deep_forward.1} parent=11 // pred_check
        %p265 = pneg %p167
      $region34: #{deep_forward.1} parent=11 // pred_check_branch
        %267 = sbr.rel (%p265) target = $region36
      $region35: #{deep_forward.1} parent=11 // pred_region
        _
      $region36: #{deep_forward.1} parent=11 // pred_fallthru
        _
      // Predicated region
      $region37: #{deep_forward.1} parent=11 // pred_check
        %p268 = pneg %p188
      $region38: #{deep_forward.1} parent=11 // pred_check_branch
        %270 = sbr.rel (%p268) target = $region40
      $region39: #{deep_forward.1} parent=11 // pred_region
        _
      $region40: #{deep_forward.1} parent=11 // pred_fallthru
        _
      // Predicated region
      $region41: #{deep_forward.1} parent=11 // pred_check
        %p271 = pneg %p209
      $region42: #{deep_forward.1} parent=11 // pred_check_branch
        %273 = sbr.rel (%p271) target = $region44
      $region43: #{deep_forward.1} parent=11 // pred_region
        _
      $region44: #{deep_forward.1} parent=11 // pred_fallthru
        _
    $region12: #{deep_forward.1} parent=5 // pred_fallthru
      _
    %p274 = scmp.lt.s32.totalorder %s15, 2
    // Predicated region
    $region45: #{deep_forward.1} parent=5 // pred_check
      %p275 = pneg %p274
    $region46: #{deep_forward.1} parent=5 // pred_check_branch
      %277 = sbr.rel (%p275) target = $region48
    $region47: #{deep_forward.1} parent=5 // pred_region
      // Predicated region
      $region49: #{deep_forward.1} parent=47 // pred_check
        %p278 = pneg %p35
      $region50: #{deep_forward.1} parent=47 // pred_check_branch
        %280 = sbr.rel (%p278) target = $region52
      $region51: #{deep_forward.1} parent=47 // pred_region
        %s281 = smul.u32 32, %s15
        %p282 = scmp.lt.s32.totalorder %s281, 63
        %s283 = scalar_select %p282, %s281, 63
        %s284 = smul.addr %s283, 4
        %s285 = scalar_lea.vmem %s0, %s284
        %s286 = smul.u32 32, %s15
      $region52: #{deep_forward.1} parent=47 // pred_fallthru
        _
    $region48: #{deep_forward.1} parent=5 // pred_fallthru
      _
    %p287 = scmp.le.s32.totalorder 1, %s15
    %p288 = scmp.lt.s32.totalorder %s15, 3
    %p289 = pnand %p287, %p288
    %p290 = pneg %p289
    // Predicated region
    $region53: #{deep_forward.1} parent=5 // pred_check
      _
    $region54: #{deep_forward.1} parent=5 // pred_check_branch
      %292 = sbr.rel (%p289) target = $region56
    $region55: #{deep_forward.1} parent=5 // pred_region
      %s293 = ssub.s32 %s15, 1
      %s294 = smul.u32 32, %s20
      %p295 = scmp.lt.s32.totalorder %s294, 63
      %s296 = scalar_select %p295, %s294, 63
      %s297 = smul.addr %s296, 4
      %s298 = scalar_lea.vmem %s0, %s297
      %p299 = pneg %p41
      %p300 = pneg %p38
      %p301 = pneg %p62
      %p302 = pneg %p59
      %p303 = pneg %p83
      %p304 = pneg %p80
      %p305 = pneg %p104
      %p306 = pneg %p101
      %p307 = pneg %p125
      %p308 = pneg %p122
      %p309 = pneg %p146
      %p310 = pneg %p143
      %p311 = pneg %p167
      %p312 = pneg %p164
      %p313 = pneg %p188
      %p314 = pneg %p185
      %p315 = pneg %p209
      %p316 = pneg %p206
      %p317 = pneg %p235
      %p318 = pneg %p232
      %s319 = smul.u32 32, %s20
      %p320 = scmp.lt.s32.totalorder %s319, 63
      %s321 = scalar_select %p320, %s319, 63
      %s322 = smul.addr %s321, 8
      %s323 = scalar_lea.vmem %s9, %s322
      %s324 = smul.u32 32, %s20
      %p325 = scmp.lt.s32.totalorder %s324, 63
      %s326 = scalar_select %p325, %s324, 63
      %s327 = smul.addr %s326, 4
      %s328 = scalar_lea.vmem %s0, %s327
      %s329 = smul.u32 32, %s20
      %s330 = smul.u32 32, %s20
      %p331 = scmp.lt.s32.totalorder %s330, 63
      %s332 = scalar_select %p331, %s330, 63
      %s333 = smul.addr %s332, 8
      %s334 = scalar_lea.vmem %s9, %s333
      %s335 = smul.u32 32, %s20
      %v337 = vld [vmem:[%s328] sm:$0xf]
      %v338 = vld [vmem:[%s328 + $0x4] sm:$0xf]
      %v339 = vld [vmem:[%s328 + $0x8] sm:$0xf]
      %v340 = vld [vmem:[%s328 + $0xc] sm:$0xf]
      %v341 = vld [vmem:[%s328 + $0x10] sm:$0xf]
      %v342 = vld [vmem:[%s328 + $0x14] sm:$0xf]
      %v343 = vld [vmem:[%s328 + $0x18] sm:$0xf]
      %v344 = vld [vmem:[%s328 + $0x1c] sm:$0xf]
      %v345 = vld [vmem:[%s328 + $0x20] sm:$0xf]
      %v346 = vld [vmem:[%s328 + $0x24] sm:$0xf]
      %v347 = vld [vmem:[%s328 + $0x28] sm:$0xf]
      %v348 = vld [vmem:[%s328 + $0x2c] sm:$0xf]
      %v349 = vld [vmem:[%s328 + $0x30] sm:$0xf]
      %v350 = vld [vmem:[%s328 + $0x34] sm:$0xf]
      %v351 = vld [vmem:[%s328 + $0x38] sm:$0xf]
      %v352 = vld [vmem:[%s328 + $0x3c] sm:$0xf]
      %v353 = vld [vmem:[%s328 + $0x40] sm:$0xf]
      %v354 = vld [vmem:[%s328 + $0x44] sm:$0xf]
      %v355 = vld [vmem:[%s328 + $0x48] sm:$0xf]
      %v356 = vld [vmem:[%s328 + $0x4c] sm:$0xf]
      %v357 = vld [vmem:[%s328 + $0x50] sm:$0xf]
      %v358 = vld [vmem:[%s328 + $0x54] sm:$0xf]
      %v359 = vld [vmem:[%s328 + $0x58] sm:$0xf]
      %v360 = vld [vmem:[%s328 + $0x5c] sm:$0xf]
      %v361 = vld [vmem:[%s328 + $0x60] sm:$0xf]
      %v362 = vld [vmem:[%s328 + $0x64] sm:$0xf]
      %v363 = vld [vmem:[%s328 + $0x68] sm:$0xf]
      %v364 = vld [vmem:[%s328 + $0x6c] sm:$0xf]
      %v365 = vld [vmem:[%s328 + $0x70] sm:$0xf]
      %v366 = vld [vmem:[%s328 + $0x74] sm:$0xf]
      %v367 = vld [vmem:[%s328 + $0x78] sm:$0xf]
      %v368 = vld [vmem:[%s328 + $0x7c] sm:$0xf]
      %v369 = vld [vmem:[%s1] sm:$0xff]
      %v370 = vld [vmem:[%s1 + $0x8] sm:$0xff]
      %v371 = vld [vmem:[%s1 + $0x10] sm:$0xff]
      %v372 = vld [vmem:[%s1 + $0x18] sm:$0xff]
      %v373 = vld [vmem:[%s1 + $0x20] sm:$0xff]
      %v374 = vld [vmem:[%s1 + $0x28] sm:$0xff]
      %v375 = vld [vmem:[%s1 + $0x30] sm:$0xff]
      %v376 = vld [vmem:[%s1 + $0x38] sm:$0xff]
      %v377 = vld [vmem:[%s1 + $0x40] sm:$0xff]
      %v378 = vld [vmem:[%s1 + $0x48] sm:$0xff]
      %v379 = vld [vmem:[%s1 + $0x50] sm:$0xff]
      %v380 = vld [vmem:[%s1 + $0x58] sm:$0xff]
      %v381 = vld [vmem:[%s1 + $0x60] sm:$0xff]
      %v382 = vld [vmem:[%s1 + $0x68] sm:$0xff]
      %v383 = vld [vmem:[%s1 + $0x70] sm:$0xff]
      %v384 = vld [vmem:[%s1 + $0x78] sm:$0xff]
      %v385 = vld [vmem:[%s2] sm:$0x3]
      %v387 = vlaneseq
      %v388 = vshrl.u32 %v387, 7
      %v389 = vsub.s32 0, %v388
      %v390 = vrot.slane %v385, %v389
      %v391 = vlaneseq
      %v392 = vshrl.u32 %v391, 7
      %v393 = vsub.s32 1, %v392
      %v394 = vrot.slane %v385, %v393
      %v429 = vunpack.c.l.b16 %v337
      %v430 = vunpack.c.l.b16 %v338
      %v431 = vunpack.c.l.b16 %v339
      %v432 = vunpack.c.l.b16 %v340
      %v433 = vunpack.c.l.b16 %v341
      %v434 = vunpack.c.l.b16 %v342
      %v435 = vunpack.c.l.b16 %v343
      %v436 = vunpack.c.l.b16 %v344
      %v437 = vunpack.c.l.b16 %v345
      %v438 = vunpack.c.l.b16 %v346
      %v439 = vunpack.c.l.b16 %v347
      %v440 = vunpack.c.l.b16 %v348
      %v441 = vunpack.c.l.b16 %v349
      %v442 = vunpack.c.l.b16 %v350
      %v443 = vunpack.c.l.b16 %v351
      %v444 = vunpack.c.l.b16 %v352
      %v445 = vunpack.c.l.b16 %v353
      %v446 = vunpack.c.l.b16 %v354
      %v447 = vunpack.c.l.b16 %v355
      %v448 = vunpack.c.l.b16 %v356
      %v449 = vunpack.c.l.b16 %v357
      %v450 = vunpack.c.l.b16 %v358
      %v451 = vunpack.c.l.b16 %v359
      %v452 = vunpack.c.l.b16 %v360
      %v453 = vunpack.c.l.b16 %v361
      %v454 = vunpack.c.l.b16 %v362
      %v455 = vunpack.c.l.b16 %v363
      %v456 = vunpack.c.l.b16 %v364
      %v457 = vunpack.c.l.b16 %v365
      %v458 = vunpack.c.l.b16 %v366
      %v459 = vunpack.c.l.b16 %v367
      %v460 = vunpack.c.l.b16 %v368
      %v461 = vpack.c.b16 %v430, %v429
      %v462 = vpack.c.b16 %v432, %v431
      %v463 = vpack.c.b16 %v434, %v433
      %v464 = vpack.c.b16 %v436, %v435
      %v465 = vpack.c.b16 %v438, %v437
      %v466 = vpack.c.b16 %v440, %v439
      %v467 = vpack.c.b16 %v442, %v441
      %v468 = vpack.c.b16 %v444, %v443
      %v469 = vpack.c.b16 %v446, %v445
      %v470 = vpack.c.b16 %v448, %v447
      %v471 = vpack.c.b16 %v450, %v449
      %v472 = vpack.c.b16 %v452, %v451
      %v473 = vpack.c.b16 %v454, %v453
      %v474 = vpack.c.b16 %v456, %v455
      %v475 = vpack.c.b16 %v458, %v457
      %v476 = vpack.c.b16 %v460, %v459
      %v509 = vunpack.c.l.b16 %v369
      %v510 = vunpack.c.h.b16 %v369
      %v511 = vunpack.c.l.b16 %v370
      %v512 = vunpack.c.h.b16 %v370
      %v513 = vunpack.c.l.b16 %v371
      %v514 = vunpack.c.h.b16 %v371
      %v515 = vunpack.c.l.b16 %v372
      %v516 = vunpack.c.h.b16 %v372
      %v517 = vunpack.c.l.b16 %v373
      %v518 = vunpack.c.h.b16 %v373
      %v519 = vunpack.c.l.b16 %v374
      %v520 = vunpack.c.h.b16 %v374
      %v521 = vunpack.c.l.b16 %v375
      %v522 = vunpack.c.h.b16 %v375
      %v523 = vunpack.c.l.b16 %v376
      %v524 = vunpack.c.h.b16 %v376
      %v525 = vunpack.c.l.b16 %v377
      %v526 = vunpack.c.h.b16 %v377
      %v527 = vunpack.c.l.b16 %v378
      %v528 = vunpack.c.h.b16 %v378
      %v529 = vunpack.c.l.b16 %v379
      %v530 = vunpack.c.h.b16 %v379
      %v531 = vunpack.c.l.b16 %v380
      %v532 = vunpack.c.h.b16 %v380
      %v533 = vunpack.c.l.b16 %v381
      %v534 = vunpack.c.h.b16 %v381
      %v535 = vunpack.c.l.b16 %v382
      %v536 = vunpack.c.h.b16 %v382
      %v537 = vunpack.c.l.b16 %v383
      %v538 = vunpack.c.h.b16 %v383
      %v539 = vunpack.c.l.b16 %v384
      %v540 = vunpack.c.h.b16 %v384
      %v541 = vpack.c.b16 %v511, %v509
      %v542 = vpack.c.b16 %v512, %v510
      %v543 = vpack.c.b16 %v515, %v513
      %v544 = vpack.c.b16 %v516, %v514
      %v545 = vpack.c.b16 %v519, %v517
      %v546 = vpack.c.b16 %v520, %v518
      %v547 = vpack.c.b16 %v523, %v521
      %v548 = vpack.c.b16 %v524, %v522
      %v549 = vpack.c.b16 %v527, %v525
      %v550 = vpack.c.b16 %v528, %v526
      %v551 = vpack.c.b16 %v531, %v529
      %v552 = vpack.c.b16 %v532, %v530
      %v553 = vpack.c.b16 %v535, %v533
      %v554 = vpack.c.b16 %v536, %v534
      %v555 = vpack.c.b16 %v539, %v537
      %v556 = vpack.c.b16 %v540, %v538
      %573 = vmatprep.subr.bf16.mxu0 %v542
      %574 = vmatpush1.bf16.msra.mxu0 %v541
      %575 = vmatprep.subr.bf16.mxu0 %v544
      %576 = vmatpush1.bf16.msra.mxu0 %v543
      %577 = vmatprep.subr.bf16.mxu0 %v546
      %578 = vmatpush1.bf16.msra.mxu0 %v545
      %579 = vmatprep.subr.bf16.mxu0 %v548
      %580 = vmatpush1.bf16.msra.mxu0 %v547
      %581 = vmatprep.subr.bf16.mxu0 %v550
      %582 = vmatpush1.bf16.msra.mxu0 %v549
      %583 = vmatprep.subr.bf16.mxu0 %v552
      %584 = vmatpush1.bf16.msra.mxu0 %v551
      %585 = vmatprep.subr.bf16.mxu0 %v554
      %586 = vmatpush1.bf16.msra.mxu0 %v553
      %587 = vmatprep.subr.bf16.mxu0 %v556
      %588 = vmatpush1.bf16.msra.mxu0 %v555
      %589 = vmatprep.subr.bf16.mxu0 0
      %590 = vmatpush1.bf16.msra.mxu0 0
      %591 = vmatprep.subr.bf16.mxu0 0
      %592 = vmatpush1.bf16.msra.mxu0 0
      %593 = vmatprep.subr.bf16.mxu0 0
      %594 = vmatpush1.bf16.msra.mxu0 0
      %595 = vmatprep.subr.bf16.mxu0 0
      %596 = vmatpush1.bf16.msra.mxu0 0
      %597 = vmatprep.subr.bf16.mxu0 0
      %598 = vmatpush1.bf16.msra.mxu0 0
      %599 = vmatprep.subr.bf16.mxu0 0
      %600 = vmatpush1.bf16.msra.mxu0 0
      %601 = vmatprep.subr.bf16.mxu0 0
      %602 = vmatpush1.bf16.msra.mxu0 0
      %603 = vmatprep.subr.bf16.mxu0 0
      %604 = vmatpush1.bf16.msra.mxu0 0
      %605 = vmatprep.mubr.bf16.mxu0 0
      %606 = vmatmul.mubr.bf16.gmra.mrb[0].mxu0 %v461
      %v607 = vpop.f32.mrb[0].mxu0
      %v608 = vadd.f32 %v390, %v607
      %v609 = vpop.f32.mrb[0].mxu0
      %v610 = vadd.f32 %v394, %v609
      %v611 = vpop.f32.mrb[0].mxu0
      %v612 = vadd.f32 %v390, %v611
      %v613 = vpop.f32.mrb[0].mxu0
      %v614 = vadd.f32 %v394, %v613
      %615 = vmatprep.mubr.bf16.mxu0 0
      %616 = vmatmul.mubr.bf16.gmra.mrb[0].mxu0 %v462
      %v617 = vpop.f32.mrb[0].mxu0
      %v618 = vadd.f32 %v390, %v617
      %v619 = vpop.f32.mrb[0].mxu0
      %v620 = vadd.f32 %v394, %v619
      %v621 = vpop.f32.mrb[0].mxu0
      %v622 = vadd.f32 %v390, %v621
      %v623 = vpop.f32.mrb[0].mxu0
      %v624 = vadd.f32 %v394, %v623
      %625 = vmatprep.mubr.bf16.mxu0 0
      %626 = vmatmul.mubr.bf16.gmra.mrb[0].mxu0 %v463
      %v627 = vpop.f32.mrb[0].mxu0
      %v628 = vadd.f32 %v390, %v627
      %v629 = vpop.f32.mrb[0].mxu0
      %v630 = vadd.f32 %v394, %v629
      %v631 = vpop.f32.mrb[0].mxu0
      %v632 = vadd.f32 %v390, %v631
      %v633 = vpop.f32.mrb[0].mxu0
      %v634 = vadd.f32 %v394, %v633
      %635 = vmatprep.mubr.bf16.mxu0 0
      %636 = vmatmul.mubr.bf16.gmra.mrb[0].mxu0 %v464
      %v637 = vpop.f32.mrb[0].mxu0
      %v638 = vadd.f32 %v390, %v637
      %v639 = vpop.f32.mrb[0].mxu0
      %v640 = vadd.f32 %v394, %v639
      %v641 = vpop.f32.mrb[0].mxu0
      %v642 = vadd.f32 %v390, %v641
      %v643 = vpop.f32.mrb[0].mxu0
      %v644 = vadd.f32 %v394, %v643
      %645 = vmatprep.mubr.bf16.mxu0 0
      %646 = vmatmul.mubr.bf16.gmra.mrb[0].mxu0 %v465
      %v647 = vpop.f32.mrb[0].mxu0
      %v648 = vadd.f32 %v390, %v647
      %v649 = vpop.f32.mrb[0].mxu0
      %v650 = vadd.f32 %v394, %v649
      %v651 = vpop.f32.mrb[0].mxu0
      %v652 = vadd.f32 %v390, %v651
      %v653 = vpop.f32.mrb[0].mxu0
      %v654 = vadd.f32 %v394, %v653
      %655 = vmatprep.mubr.bf16.mxu0 0
      %656 = vmatmul.mubr.bf16.gmra.mrb[0].mxu0 %v466
      %v657 = vpop.f32.mrb[0].mxu0
      %v658 = vadd.f32 %v390, %v657
      %v659 = vpop.f32.mrb[0].mxu0
      %v660 = vadd.f32 %v394, %v659
      %v661 = vpop.f32.mrb[0].mxu0
      %v662 = vadd.f32 %v390, %v661
      %v663 = vpop.f32.mrb[0].mxu0
      %v664 = vadd.f32 %v394, %v663
      %665 = vmatprep.mubr.bf16.mxu0 0
      %666 = vmatmul.mubr.bf16.gmra.mrb[0].mxu0 %v467
      %v667 = vpop.f32.mrb[0].mxu0
      %v668 = vadd.f32 %v390, %v667
      %v669 = vpop.f32.mrb[0].mxu0
      %v670 = vadd.f32 %v394, %v669
      %v671 = vpop.f32.mrb[0].mxu0
      %v672 = vadd.f32 %v390, %v671
      %v673 = vpop.f32.mrb[0].mxu0
      %v674 = vadd.f32 %v394, %v673
      %675 = vmatprep.mubr.bf16.mxu0 0
      %676 = vmatmul.mubr.bf16.gmra.mrb[0].mxu0 %v468
      %v677 = vpop.f32.mrb[0].mxu0
      %v678 = vadd.f32 %v390, %v677
      %v679 = vpop.f32.mrb[0].mxu0
      %v680 = vadd.f32 %v394, %v679
      %v681 = vpop.f32.mrb[0].mxu0
      %v682 = vadd.f32 %v390, %v681
      %v683 = vpop.f32.mrb[0].mxu0
      %v684 = vadd.f32 %v394, %v683
      %685 = vmatprep.mubr.bf16.mxu0 0
      %686 = vmatmul.mubr.bf16.gmra.mrb[0].mxu0 %v469
      %v687 = vpop.f32.mrb[0].mxu0
      %v688 = vadd.f32 %v390, %v687
      %v689 = vpop.f32.mrb[0].mxu0
      %v690 = vadd.f32 %v394, %v689
      %v691 = vpop.f32.mrb[0].mxu0
      %v692 = vadd.f32 %v390, %v691
      %v693 = vpop.f32.mrb[0].mxu0
      %v694 = vadd.f32 %v394, %v693
      %695 = vmatprep.mubr.bf16.mxu0 0
      %696 = vmatmul.mubr.bf16.gmra.mrb[0].mxu0 %v470
      %v697 = vpop.f32.mrb[0].mxu0
      %v698 = vadd.f32 %v390, %v697
      %v699 = vpop.f32.mrb[0].mxu0
      %v700 = vadd.f32 %v394, %v699
      %v701 = vpop.f32.mrb[0].mxu0
      %v702 = vadd.f32 %v390, %v701
      %v703 = vpop.f32.mrb[0].mxu0
      %v704 = vadd.f32 %v394, %v703
      %705 = vmatprep.mubr.bf16.mxu0 0
      %706 = vmatmul.mubr.bf16.gmra.mrb[0].mxu0 %v471
      %v707 = vpop.f32.mrb[0].mxu0
      %v708 = vadd.f32 %v390, %v707
      %v709 = vpop.f32.mrb[0].mxu0
      %v710 = vadd.f32 %v394, %v709
      %v711 = vpop.f32.mrb[0].mxu0
      %v712 = vadd.f32 %v390, %v711
      %v713 = vpop.f32.mrb[0].mxu0
      %v714 = vadd.f32 %v394, %v713
      %715 = vmatprep.mubr.bf16.mxu0 0
      %716 = vmatmul.mubr.bf16.gmra.mrb[0].mxu0 %v472
      %v717 = vpop.f32.mrb[0].mxu0
      %v718 = vadd.f32 %v390, %v717
      %v719 = vpop.f32.mrb[0].mxu0
      %v720 = vadd.f32 %v394, %v719
      %v721 = vpop.f32.mrb[0].mxu0
      %v722 = vadd.f32 %v390, %v721
      %v723 = vpop.f32.mrb[0].mxu0
      %v724 = vadd.f32 %v394, %v723
      %725 = vmatprep.mubr.bf16.mxu0 0
      %726 = vmatmul.mubr.bf16.gmra.mrb[0].mxu0 %v473
      %v727 = vpop.f32.mrb[0].mxu0
      %v728 = vadd.f32 %v390, %v727
      %v729 = vpop.f32.mrb[0].mxu0
      %v730 = vadd.f32 %v394, %v729
      %v731 = vpop.f32.mrb[0].mxu0
      %v732 = vadd.f32 %v390, %v731
      %v733 = vpop.f32.mrb[0].mxu0
      %v734 = vadd.f32 %v394, %v733
      %735 = vmatprep.mubr.bf16.mxu0 0
      %736 = vmatmul.mubr.bf16.gmra.mrb[0].mxu0 %v474
      %v737 = vpop.f32.mrb[0].mxu0
      %v738 = vadd.f32 %v390, %v737
      %v739 = vpop.f32.mrb[0].mxu0
      %v740 = vadd.f32 %v394, %v739
      %v741 = vpop.f32.mrb[0].mxu0
      %v742 = vadd.f32 %v390, %v741
      %v743 = vpop.f32.mrb[0].mxu0
      %v744 = vadd.f32 %v394, %v743
      %745 = vmatprep.mubr.bf16.mxu0 0
      %746 = vmatmul.mubr.bf16.gmra.mrb[0].mxu0 %v475
      %v747 = vpop.f32.mrb[0].mxu0
      %v748 = vadd.f32 %v390, %v747
      %v749 = vpop.f32.mrb[0].mxu0
      %v750 = vadd.f32 %v394, %v749
      %v751 = vpop.f32.mrb[0].mxu0
      %v752 = vadd.f32 %v390, %v751
      %v753 = vpop.f32.mrb[0].mxu0
      %v754 = vadd.f32 %v394, %v753
      %755 = vmatprep.mubr.bf16.mxu0 0
      %756 = vmatmul.mubr.bf16.gmra.mrb[0].mxu0 %v476
      %v757 = vpop.f32.mrb[0].mxu0
      %v758 = vadd.f32 %v390, %v757
      %v759 = vpop.f32.mrb[0].mxu0
      %v760 = vadd.f32 %v394, %v759
      %v761 = vpop.f32.mrb[0].mxu0
      %v762 = vadd.f32 %v390, %v761
      %v763 = vpop.f32.mrb[0].mxu0
      %v764 = vadd.f32 %v394, %v763
      %765 = vdwg.mxu0
      %v766 = vmax.f32 %v608, 0.0
      %v767 = vmax.f32 %v610, 0.0
      %v768 = vmax.f32 %v612, 0.0
      %v769 = vmax.f32 %v614, 0.0
      %v770 = vmax.f32 %v618, 0.0
      %v771 = vmax.f32 %v620, 0.0
      %v772 = vmax.f32 %v622, 0.0
      %v773 = vmax.f32 %v624, 0.0
      %v774 = vmax.f32 %v628, 0.0
      %v775 = vmax.f32 %v630, 0.0
      %v776 = vmax.f32 %v632, 0.0
      %v777 = vmax.f32 %v634, 0.0
      %v778 = vmax.f32 %v638, 0.0
      %v779 = vmax.f32 %v640, 0.0
      %v780 = vmax.f32 %v642, 0.0
      %v781 = vmax.f32 %v644, 0.0
      %v782 = vmax.f32 %v648, 0.0
      %v783 = vmax.f32 %v650, 0.0
      %v784 = vmax.f32 %v652, 0.0
      %v785 = vmax.f32 %v654, 0.0
      %v786 = vmax.f32 %v658, 0.0
      %v787 = vmax.f32 %v660, 0.0
      %v788 = vmax.f32 %v662, 0.0
      %v789 = vmax.f32 %v664, 0.0
      %v790 = vmax.f32 %v668, 0.0
      %v791 = vmax.f32 %v670, 0.0
      %v792 = vmax.f32 %v672, 0.0
      %v793 = vmax.f32 %v674, 0.0
      %v794 = vmax.f32 %v678, 0.0
      %v795 = vmax.f32 %v680, 0.0
      %v796 = vmax.f32 %v682, 0.0
      %v797 = vmax.f32 %v684, 0.0
      %v798 = vmax.f32 %v688, 0.0
      %v799 = vmax.f32 %v690, 0.0
      %v800 = vmax.f32 %v692, 0.0
      %v801 = vmax.f32 %v694, 0.0
      %v802 = vmax.f32 %v698, 0.0
      %v803 = vmax.f32 %v700, 0.0
      %v804 = vmax.f32 %v702, 0.0
      %v805 = vmax.f32 %v704, 0.0
      %v806 = vmax.f32 %v708, 0.0
      %v807 = vmax.f32 %v710, 0.0
      %v808 = vmax.f32 %v712, 0.0
      %v809 = vmax.f32 %v714, 0.0
      %v810 = vmax.f32 %v718, 0.0
      %v811 = vmax.f32 %v720, 0.0
      %v812 = vmax.f32 %v722, 0.0
      %v813 = vmax.f32 %v724, 0.0
      %v814 = vmax.f32 %v728, 0.0
      %v815 = vmax.f32 %v730, 0.0
      %v816 = vmax.f32 %v732, 0.0
      %v817 = vmax.f32 %v734, 0.0
      %v818 = vmax.f32 %v738, 0.0
      %v819 = vmax.f32 %v740, 0.0
      %v820 = vmax.f32 %v742, 0.0
      %v821 = vmax.f32 %v744, 0.0
      %v822 = vmax.f32 %v748, 0.0
      %v823 = vmax.f32 %v750, 0.0
      %v824 = vmax.f32 %v752, 0.0
      %v825 = vmax.f32 %v754, 0.0
      %v826 = vmax.f32 %v758, 0.0
      %v827 = vmax.f32 %v760, 0.0
      %v828 = vmax.f32 %v762, 0.0
      %v829 = vmax.f32 %v764, 0.0
      %v830 = vpack.c.bf16 %v768, %v766
      %v831 = vpack.c.bf16 %v769, %v767
      %v832 = vpack.c.bf16 %v772, %v770
      %v833 = vpack.c.bf16 %v773, %v771
      %v834 = vpack.c.bf16 %v776, %v774
      %v835 = vpack.c.bf16 %v777, %v775
      %v836 = vpack.c.bf16 %v780, %v778
      %v837 = vpack.c.bf16 %v781, %v779
      %v838 = vpack.c.bf16 %v784, %v782
      %v839 = vpack.c.bf16 %v785, %v783
      %v840 = vpack.c.bf16 %v788, %v786
      %v841 = vpack.c.bf16 %v789, %v787
      %v842 = vpack.c.bf16 %v792, %v790
      %v843 = vpack.c.bf16 %v793, %v791
      %v844 = vpack.c.bf16 %v796, %v794
      %v845 = vpack.c.bf16 %v797, %v795
      %v846 = vpack.c.bf16 %v800, %v798
      %v847 = vpack.c.bf16 %v801, %v799
      %v848 = vpack.c.bf16 %v804, %v802
      %v849 = vpack.c.bf16 %v805, %v803
      %v850 = vpack.c.bf16 %v808, %v806
      %v851 = vpack.c.bf16 %v809, %v807
      %v852 = vpack.c.bf16 %v812, %v810
      %v853 = vpack.c.bf16 %v813, %v811
      %v854 = vpack.c.bf16 %v816, %v814
      %v855 = vpack.c.bf16 %v817, %v815
      %v856 = vpack.c.bf16 %v820, %v818
      %v857 = vpack.c.bf16 %v821, %v819
      %v858 = vpack.c.bf16 %v824, %v822
      %v859 = vpack.c.bf16 %v825, %v823
      %v860 = vpack.c.bf16 %v828, %v826
      %v861 = vpack.c.bf16 %v829, %v827
      %v862 = vld [vmem:[%s3] sm:$0xff]
      %v863 = vld [vmem:[%s3 + $0x8] sm:$0xff]
      %v864 = vld [vmem:[%s3 + $0x10] sm:$0xff]
      %v865 = vld [vmem:[%s3 + $0x18] sm:$0xff]
      %v866 = vld [vmem:[%s3 + $0x20] sm:$0xff]
      %v867 = vld [vmem:[%s3 + $0x28] sm:$0xff]
      %v868 = vld [vmem:[%s3 + $0x30] sm:$0xff]
      %v869 = vld [vmem:[%s3 + $0x38] sm:$0xff]
      %v870 = vld [vmem:[%s3 + $0x40] sm:$0xff]
      %v871 = vld [vmem:[%s3 + $0x48] sm:$0xff]
      %v872 = vld [vmem:[%s3 + $0x50] sm:$0xff]
      %v873 = vld [vmem:[%s3 + $0x58] sm:$0xff]
      %v874 = vld [vmem:[%s3 + $0x60] sm:$0xff]
      %v875 = vld [vmem:[%s3 + $0x68] sm:$0xff]
      %v876 = vld [vmem:[%s3 + $0x70] sm:$0xff]
      %v877 = vld [vmem:[%s3 + $0x78] sm:$0xff]
      %v878 = vld [vmem:[%s3 + $0x80] sm:$0xff]
      %v879 = vld [vmem:[%s3 + $0x88] sm:$0xff]
      %v880 = vld [vmem:[%s3 + $0x90] sm:$0xff]
      %v881 = vld [vmem:[%s3 + $0x98] sm:$0xff]
      %v882 = vld [vmem:[%s3 + $0xa0] sm:$0xff]
      %v883 = vld [vmem:[%s3 + $0xa8] sm:$0xff]
      %v884 = vld [vmem:[%s3 + $0xb0] sm:$0xff]
      %v885 = vld [vmem:[%s3 + $0xb8] sm:$0xff]
      %v886 = vld [vmem:[%s3 + $0xc0] sm:$0xff]
      %v887 = vld [vmem:[%s3 + $0xc8] sm:$0xff]
      %v888 = vld [vmem:[%s3 + $0xd0] sm:$0xff]
      %v889 = vld [vmem:[%s3 + $0xd8] sm:$0xff]
      %v890 = vld [vmem:[%s3 + $0xe0] sm:$0xff]
      %v891 = vld [vmem:[%s3 + $0xe8] sm:$0xff]
      %v892 = vld [vmem:[%s3 + $0xf0] sm:$0xff]
      %v893 = vld [vmem:[%s3 + $0xf8] sm:$0xff]
      %v894 = vld [vmem:[%s4] sm:$0x3]
      %v896 = vlaneseq
      %v897 = vshrl.u32 %v896, 7
      %v898 = vsub.s32 0, %v897
      %v899 = vrot.slane %v894, %v898
      %v900 = vlaneseq
      %v901 = vshrl.u32 %v900, 7
      %v902 = vsub.s32 1, %v901
      %v903 = vrot.slane %v894, %v902
      %v938 = vunpack.c.l.b16 %v862
      %v939 = vunpack.c.h.b16 %v862
      %v940 = vunpack.c.l.b16 %v863
      %v941 = vunpack.c.h.b16 %v863
      %v942 = vunpack.c.l.b16 %v864
      %v943 = vunpack.c.h.b16 %v864
      %v944 = vunpack.c.l.b16 %v865
      %v945 = vunpack.c.h.b16 %v865
      %v946 = vunpack.c.l.b16 %v866
      %v947 = vunpack.c.h.b16 %v866
      %v948 = vunpack.c.l.b16 %v867
      %v949 = vunpack.c.h.b16 %v867
      %v950 = vunpack.c.l.b16 %v868
      %v951 = vunpack.c.h.b16 %v868
      %v952 = vunpack.c.l.b16 %v869
      %v953 = vunpack.c.h.b16 %v869
      %v954 = vunpack.c.l.b16 %v870
      %v955 = vunpack.c.h.b16 %v870
      %v956 = vunpack.c.l.b16 %v871
      %v957 = vunpack.c.h.b16 %v871
      %v958 = vunpack.c.l.b16 %v872
      %v959 = vunpack.c.h.b16 %v872
      %v960 = vunpack.c.l.b16 %v873
      %v961 = vunpack.c.h.b16 %v873
      %v962 = vunpack.c.l.b16 %v874
      %v963 = vunpack.c.h.b16 %v874
      %v964 = vunpack.c.l.b16 %v875
      %v965 = vunpack.c.h.b16 %v875
      %v966 = vunpack.c.l.b16 %v876
      %v967 = vunpack.c.h.b16 %v876
      %v968 = vunpack.c.l.b16 %v877
      %v969 = vunpack.c.h.b16 %v877
      %v970 = vunpack.c.l.b16 %v878
      %v971 = vunpack.c.h.b16 %v878
      %v972 = vunpack.c.l.b16 %v879
      %v973 = vunpack.c.h.b16 %v879
      %v974 = vunpack.c.l.b16 %v880
      %v975 = vunpack.c.h.b16 %v880
      %v976 = vunpack.c.l.b16 %v881
      %v977 = vunpack.c.h.b16 %v881
      %v978 = vunpack.c.l.b16 %v882
      %v979 = vunpack.c.h.b16 %v882
      %v980 = vunpack.c.l.b16 %v883
      %v981 = vunpack.c.h.b16 %v883
      %v982 = vunpack.c.l.b16 %v884
      %v983 = vunpack.c.h.b16 %v884
      %v984 = vunpack.c.l.b16 %v885
      %v985 = vunpack.c.h.b16 %v885
      %v986 = vunpack.c.l.b16 %v886
      %v987 = vunpack.c.h.b16 %v886
      %v988 = vunpack.c.l.b16 %v887
      %v989 = vunpack.c.h.b16 %v887
      %v990 = vunpack.c.l.b16 %v888
      %v991 = vunpack.c.h.b16 %v888
      %v992 = vunpack.c.l.b16 %v889
      %v993 = vunpack.c.h.b16 %v889
      %v994 = vunpack.c.l.b16 %v890
      %v995 = vunpack.c.h.b16 %v890
      %v996 = vunpack.c.l.b16 %v891
      %v997 = vunpack.c.h.b16 %v891
      %v998 = vunpack.c.l.b16 %v892
      %v999 = vunpack.c.h.b16 %v892
      %v1000 = vunpack.c.l.b16 %v893
      %v1001 = vunpack.c.h.b16 %v893
      %v1002 = vpack.c.b16 %v940, %v938
      %v1003 = vpack.c.b16 %v941, %v939
      %v1004 = vpack.c.b16 %v944, %v942
      %v1005 = vpack.c.b16 %v945, %v943
      %v1006 = vpack.c.b16 %v948, %v946
      %v1007 = vpack.c.b16 %v949, %v947
      %v1008 = vpack.c.b16 %v952, %v950
      %v1009 = vpack.c.b16 %v953, %v951
      %v1010 = vpack.c.b16 %v956, %v954
      %v1011 = vpack.c.b16 %v957, %v955
      %v1012 = vpack.c.b16 %v960, %v958
      %v1013 = vpack.c.b16 %v961, %v959
      %v1014 = vpack.c.b16 %v964, %v962
      %v1015 = vpack.c.b16 %v965, %v963
      %v1016 = vpack.c.b16 %v968, %v966
      %v1017 = vpack.c.b16 %v969, %v967
      %v1018 = vpack.c.b16 %v972, %v970
      %v1019 = vpack.c.b16 %v973, %v971
      %v1020 = vpack.c.b16 %v976, %v974
      %v1021 = vpack.c.b16 %v977, %v975
      %v1022 = vpack.c.b16 %v980, %v978
      %v1023 = vpack.c.b16 %v981, %v979
      %v1024 = vpack.c.b16 %v984, %v982
      %v1025 = vpack.c.b16 %v985, %v983
      %v1026 = vpack.c.b16 %v988, %v986
      %v1027 = vpack.c.b16 %v989, %v987
      %v1028 = vpack.c.b16 %v992, %v990
      %v1029 = vpack.c.b16 %v993, %v991
      %v1030 = vpack.c.b16 %v996, %v994
      %v1031 = vpack.c.b16 %v997, %v995
      %v1032 = vpack.c.b16 %v1000, %v998
      %v1033 = vpack.c.b16 %v1001, %v999
      %1066 = vmatprep.subr.bf16.mxu0 %v1003
      %1067 = vmatpush1.bf16.msra.mxu0 %v1002
      %1068 = vmatprep.subr.bf16.mxu0 %v1005
      %1069 = vmatpush1.bf16.msra.mxu0 %v1004
      %1070 = vmatprep.subr.bf16.mxu0 %v1007
      %1071 = vmatpush1.bf16.msra.mxu0 %v1006
      %1072 = vmatprep.subr.bf16.mxu0 %v1009
      %1073 = vmatpush1.bf16.msra.mxu0 %v1008
      %1074 = vmatprep.subr.bf16.mxu0 %v1011
      %1075 = vmatpush1.bf16.msra.mxu0 %v1010
      %1076 = vmatprep.subr.bf16.mxu0 %v1013
      %1077 = vmatpush1.bf16.msra.mxu0 %v1012
      %1078 = vmatprep.subr.bf16.mxu0 %v1015
      %1079 = vmatpush1.bf16.msra.mxu0 %v1014
      %1080 = vmatprep.subr.bf16.mxu0 %v1017
      %1081 = vmatpush1.bf16.msra.mxu0 %v1016
      %1082 = vmatprep.subr.bf16.mxu0 %v1019
      %1083 = vmatpush1.bf16.msra.mxu0 %v1018
      %1084 = vmatprep.subr.bf16.mxu0 %v1021
      %1085 = vmatpush1.bf16.msra.mxu0 %v1020
      %1086 = vmatprep.subr.bf16.mxu0 %v1023
      %1087 = vmatpush1.bf16.msra.mxu0 %v1022
      %1088 = vmatprep.subr.bf16.mxu0 %v1025
      %1089 = vmatpush1.bf16.msra.mxu0 %v1024
      %1090 = vmatprep.subr.bf16.mxu0 %v1027
      %1091 = vmatpush1.bf16.msra.mxu0 %v1026
      %1092 = vmatprep.subr.bf16.mxu0 %v1029
      %1093 = vmatpush1.bf16.msra.mxu0 %v1028
      %1094 = vmatprep.subr.bf16.mxu0 %v1031
      %1095 = vmatpush1.bf16.msra.mxu0 %v1030
      %1096 = vmatprep.subr.bf16.mxu0 %v1033
      %1097 = vmatpush1.bf16.msra.mxu0 %v1032
      %1098 = vmatprep.mubr.bf16.mxu0 %v831
      %1099 = vmatmul.mubr.bf16.gmra.mrb[0].mxu0 %v830
      %v1100 = vpop.f32.mrb[0].mxu0
      %v1101 = vadd.f32 %v899, %v1100
      %v1102 = vpop.f32.mrb[0].mxu0
      %v1103 = vadd.f32 %v903, %v1102
      %v1104 = vpop.f32.mrb[0].mxu0
      %v1105 = vadd.f32 %v899, %v1104
      %v1106 = vpop.f32.mrb[0].mxu0
      %v1107 = vadd.f32 %v903, %v1106
      %1108 = vmatprep.mubr.bf16.mxu0 %v833
      %1109 = vmatmul.mubr.bf16.gmra.mrb[0].mxu0 %v832
      %v1110 = vpop.f32.mrb[0].mxu0
      %v1111 = vadd.f32 %v899, %v1110
      %v1112 = vpop.f32.mrb[0].mxu0
      %v1113 = vadd.f32 %v903, %v1112
      %v1114 = vpop.f32.mrb[0].mxu0
      %v1115 = vadd.f32 %v899, %v1114
      %v1116 = vpop.f32.mrb[0].mxu0
      %v1117 = vadd.f32 %v903, %v1116
      %1118 = vmatprep.mubr.bf16.mxu0 %v835
      %1119 = vmatmul.mubr.bf16.gmra.mrb[0].mxu0 %v834
      %v1120 = vpop.f32.mrb[0].mxu0
      %v1121 = vadd.f32 %v899, %v1120
      %v1122 = vpop.f32.mrb[0].mxu0
      %v1123 = vadd.f32 %v903, %v1122
      %v1124 = vpop.f32.mrb[0].mxu0
      %v1125 = vadd.f32 %v899, %v1124
      %v1126 = vpop.f32.mrb[0].mxu0
      %v1127 = vadd.f32 %v903, %v1126
      %1128 = vmatprep.mubr.bf16.mxu0 %v837
      %1129 = vmatmul.mubr.bf16.gmra.mrb[0].mxu0 %v836
      %v1130 = vpop.f32.mrb[0].mxu0
      %v1131 = vadd.f32 %v899, %v1130
      %v1132 = vpop.f32.mrb[0].mxu0
      %v1133 = vadd.f32 %v903, %v1132
      %v1134 = vpop.f32.mrb[0].mxu0
      %v1135 = vadd.f32 %v899, %v1134
      %v1136 = vpop.f32.mrb[0].mxu0
      %v1137 = vadd.f32 %v903, %v1136
      %1138 = vmatprep.mubr.bf16.mxu0 %v839
      %1139 = vmatmul.mubr.bf16.gmra.mrb[0].mxu0 %v838
      %v1140 = vpop.f32.mrb[0].mxu0
      %v1141 = vadd.f32 %v899, %v1140
      %v1142 = vpop.f32.mrb[0].mxu0
      %v1143 = vadd.f32 %v903, %v1142
      %v1144 = vpop.f32.mrb[0].mxu0
      %v1145 = vadd.f32 %v899, %v1144
      %v1146 = vpop.f32.mrb[0].mxu0
      %v1147 = vadd.f32 %v903, %v1146
      %1148 = vmatprep.mubr.bf16.mxu0 %v841
      %1149 = vmatmul.mubr.bf16.gmra.mrb[0].mxu0 %v840
      %v1150 = vpop.f32.mrb[0].mxu0
      %v1151 = vadd.f32 %v899, %v1150
      %v1152 = vpop.f32.mrb[0].mxu0
      %v1153 = vadd.f32 %v903, %v1152
      %v1154 = vpop.f32.mrb[0].mxu0
      %v1155 = vadd.f32 %v899, %v1154
      %v1156 = vpop.f32.mrb[0].mxu0
      %v1157 = vadd.f32 %v903, %v1156
      %1158 = vmatprep.mubr.bf16.mxu0 %v843
      %1159 = vmatmul.mubr.bf16.gmra.mrb[0].mxu0 %v842
      %v1160 = vpop.f32.mrb[0].mxu0
      %v1161 = vadd.f32 %v899, %v1160
      %v1162 = vpop.f32.mrb[0].mxu0
      %v1163 = vadd.f32 %v903, %v1162
      %v1164 = vpop.f32.mrb[0].mxu0
      %v1165 = vadd.f32 %v899, %v1164
      %v1166 = vpop.f32.mrb[0].mxu0
      %v1167 = vadd.f32 %v903, %v1166
      %1168 = vmatprep.mubr.bf16.mxu0 %v845
      %1169 = vmatmul.mubr.bf16.gmra.mrb[0].mxu0 %v844
      %v1170 = vpop.f32.mrb[0].mxu0
      %v1171 = vadd.f32 %v899, %v1170
      %v1172 = vpop.f32.mrb[0].mxu0
      %v1173 = vadd.f32 %v903, %v1172
      %v1174 = vpop.f32.mrb[0].mxu0
      %v1175 = vadd.f32 %v899, %v1174
      %v1176 = vpop.f32.mrb[0].mxu0
      %v1177 = vadd.f32 %v903, %v1176
      %1178 = vmatprep.mubr.bf16.mxu0 %v847
      %1179 = vmatmul.mubr.bf16.gmra.mrb[0].mxu0 %v846
      %v1180 = vpop.f32.mrb[0].mxu0
      %v1181 = vadd.f32 %v899, %v1180
      %v1182 = vpop.f32.mrb[0].mxu0
      %v1183 = vadd.f32 %v903, %v1182
      %v1184 = vpop.f32.mrb[0].mxu0
      %v1185 = vadd.f32 %v899, %v1184
      %v1186 = vpop.f32.mrb[0].mxu0
      %v1187 = vadd.f32 %v903, %v1186
      %1188 = vmatprep.mubr.bf16.mxu0 %v849
      %1189 = vmatmul.mubr.bf16.gmra.mrb[0].mxu0 %v848
      %v1190 = vpop.f32.mrb[0].mxu0
      %v1191 = vadd.f32 %v899, %v1190
      %v1192 = vpop.f32.mrb[0].mxu0
      %v1193 = vadd.f32 %v903, %v1192
      %v1194 = vpop.f32.mrb[0].mxu0
      %v1195 = vadd.f32 %v899, %v1194
      %v1196 = vpop.f32.mrb[0].mxu0
      %v1197 = vadd.f32 %v903, %v1196
      %1198 = vmatprep.mubr.bf16.mxu0 %v851
      %1199 = vmatmul.mubr.bf16.gmra.mrb[0].mxu0 %v850
      %v1200 = vpop.f32.mrb[0].mxu0
      %v1201 = vadd.f32 %v899, %v1200
      %v1202 = vpop.f32.mrb[0].mxu0
      %v1203 = vadd.f32 %v903, %v1202
      %v1204 = vpop.f32.mrb[0].mxu0
      %v1205 = vadd.f32 %v899, %v1204
      %v1206 = vpop.f32.mrb[0].mxu0
      %v1207 = vadd.f32 %v903, %v1206
      %1208 = vmatprep.mubr.bf16.mxu0 %v853
      %1209 = vmatmul.mubr.bf16.gmra.mrb[0].mxu0 %v852
      %v1210 = vpop.f32.mrb[0].mxu0
      %v1211 = vadd.f32 %v899, %v1210
      %v1212 = vpop.f32.mrb[0].mxu0
      %v1213 = vadd.f32 %v903, %v1212
      %v1214 = vpop.f32.mrb[0].mxu0
      %v1215 = vadd.f32 %v899, %v1214
      %v1216 = vpop.f32.mrb[0].mxu0
      %v1217 = vadd.f32 %v903, %v1216
      %1218 = vmatprep.mubr.bf16.mxu0 %v855
      %1219 = vmatmul.mubr.bf16.gmra.mrb[0].mxu0 %v854
      %v1220 = vpop.f32.mrb[0].mxu0
      %v1221 = vadd.f32 %v899, %v1220
      %v1222 = vpop.f32.mrb[0].mxu0
      %v1223 = vadd.f32 %v903, %v1222
      %v1224 = vpop.f32.mrb[0].mxu0
      %v1225 = vadd.f32 %v899, %v1224
      %v1226 = vpop.f32.mrb[0].mxu0
      %v1227 = vadd.f32 %v903, %v1226
      %1228 = vmatprep.mubr.bf16.mxu0 %v857
      %1229 = vmatmul.mubr.bf16.gmra.mrb[0].mxu0 %v856
      %v1230 = vpop.f32.mrb[0].mxu0
      %v1231 = vadd.f32 %v899, %v1230
      %v1232 = vpop.f32.mrb[0].mxu0
      %v1233 = vadd.f32 %v903, %v1232
      %v1234 = vpop.f32.mrb[0].mxu0
      %v1235 = vadd.f32 %v899, %v1234
      %v1236 = vpop.f32.mrb[0].mxu0
      %v1237 = vadd.f32 %v903, %v1236
      %1238 = vmatprep.mubr.bf16.mxu0 %v859
      %1239 = vmatmul.mubr.bf16.gmra.mrb[0].mxu0 %v858
      %v1240 = vpop.f32.mrb[0].mxu0
      %v1241 = vadd.f32 %v899, %v1240
      %v1242 = vpop.f32.mrb[0].mxu0
      %v1243 = vadd.f32 %v903, %v1242
      %v1244 = vpop.f32.mrb[0].mxu0
      %v1245 = vadd.f32 %v899, %v1244
      %v1246 = vpop.f32.mrb[0].mxu0
      %v1247 = vadd.f32 %v903, %v1246
      %1248 = vmatprep.mubr.bf16.mxu0 %v861
      %1249 = vmatmul.mubr.bf16.gmra.mrb[0].mxu0 %v860
      %v1250 = vpop.f32.mrb[0].mxu0
      %v1251 = vadd.f32 %v899, %v1250
      %v1252 = vpop.f32.mrb[0].mxu0
      %v1253 = vadd.f32 %v903, %v1252
      %v1254 = vpop.f32.mrb[0].mxu0
      %v1255 = vadd.f32 %v899, %v1254
      %v1256 = vpop.f32.mrb[0].mxu0
      %v1257 = vadd.f32 %v903, %v1256
      %1258 = vdwg.mxu0
      %v1259 = vmax.f32 %v1101, 0.0
      %v1260 = vmax.f32 %v1103, 0.0
      %v1261 = vmax.f32 %v1105, 0.0
      %v1262 = vmax.f32 %v1107, 0.0
      %v1263 = vmax.f32 %v1111, 0.0
      %v1264 = vmax.f32 %v1113, 0.0
      %v1265 = vmax.f32 %v1115, 0.0
      %v1266 = vmax.f32 %v1117, 0.0
      %v1267 = vmax.f32 %v1121, 0.0
      %v1268 = vmax.f32 %v1123, 0.0
      %v1269 = vmax.f32 %v1125, 0.0
      %v1270 = vmax.f32 %v1127, 0.0
      %v1271 = vmax.f32 %v1131, 0.0
      %v1272 = vmax.f32 %v1133, 0.0
      %v1273 = vmax.f32 %v1135, 0.0
      %v1274 = vmax.f32 %v1137, 0.0
      %v1275 = vmax.f32 %v1141, 0.0
      %v1276 = vmax.f32 %v1143, 0.0
      %v1277 = vmax.f32 %v1145, 0.0
      %v1278 = vmax.f32 %v1147, 0.0
      %v1279 = vmax.f32 %v1151, 0.0
      %v1280 = vmax.f32 %v1153, 0.0
      %v1281 = vmax.f32 %v1155, 0.0
      %v1282 = vmax.f32 %v1157, 0.0
      %v1283 = vmax.f32 %v1161, 0.0
      %v1284 = vmax.f32 %v1163, 0.0
      %v1285 = vmax.f32 %v1165, 0.0
      %v1286 = vmax.f32 %v1167, 0.0
      %v1287 = vmax.f32 %v1171, 0.0
      %v1288 = vmax.f32 %v1173, 0.0
      %v1289 = vmax.f32 %v1175, 0.0
      %v1290 = vmax.f32 %v1177, 0.0
      %v1291 = vmax.f32 %v1181, 0.0
      %v1292 = vmax.f32 %v1183, 0.0
      %v1293 = vmax.f32 %v1185, 0.0
      %v1294 = vmax.f32 %v1187, 0.0
      %v1295 = vmax.f32 %v1191, 0.0
      %v1296 = vmax.f32 %v1193, 0.0
      %v1297 = vmax.f32 %v1195, 0.0
      %v1298 = vmax.f32 %v1197, 0.0
      %v1299 = vmax.f32 %v1201, 0.0
      %v1300 = vmax.f32 %v1203, 0.0
      %v1301 = vmax.f32 %v1205, 0.0
      %v1302 = vmax.f32 %v1207, 0.0
      %v1303 = vmax.f32 %v1211, 0.0
      %v1304 = vmax.f32 %v1213, 0.0
      %v1305 = vmax.f32 %v1215, 0.0
      %v1306 = vmax.f32 %v1217, 0.0
      %v1307 = vmax.f32 %v1221, 0.0
      %v1308 = vmax.f32 %v1223, 0.0
      %v1309 = vmax.f32 %v1225, 0.0
      %v1310 = vmax.f32 %v1227, 0.0
      %v1311 = vmax.f32 %v1231, 0.0
      %v1312 = vmax.f32 %v1233, 0.0
      %v1313 = vmax.f32 %v1235, 0.0
      %v1314 = vmax.f32 %v1237, 0.0
      %v1315 = vmax.f32 %v1241, 0.0
      %v1316 = vmax.f32 %v1243, 0.0
      %v1317 = vmax.f32 %v1245, 0.0
      %v1318 = vmax.f32 %v1247, 0.0
      %v1319 = vmax.f32 %v1251, 0.0
      %v1320 = vmax.f32 %v1253, 0.0
      %v1321 = vmax.f32 %v1255, 0.0
      %v1322 = vmax.f32 %v1257, 0.0
      %v1323 = vpack.c.bf16 %v1261, %v1259
      %v1324 = vpack.c.bf16 %v1262, %v1260
      %v1325 = vpack.c.bf16 %v1265, %v1263
      %v1326 = vpack.c.bf16 %v1266, %v1264
      %v1327 = vpack.c.bf16 %v1269, %v1267
      %v1328 = vpack.c.bf16 %v1270, %v1268
      %v1329 = vpack.c.bf16 %v1273, %v1271
      %v1330 = vpack.c.bf16 %v1274, %v1272
      %v1331 = vpack.c.bf16 %v1277, %v1275
      %v1332 = vpack.c.bf16 %v1278, %v1276
      %v1333 = vpack.c.bf16 %v1281, %v1279
      %v1334 = vpack.c.bf16 %v1282, %v1280
      %v1335 = vpack.c.bf16 %v1285, %v1283
      %v1336 = vpack.c.bf16 %v1286, %v1284
      %v1337 = vpack.c.bf16 %v1289, %v1287
      %v1338 = vpack.c.bf16 %v1290, %v1288
      %v1339 = vpack.c.bf16 %v1293, %v1291
      %v1340 = vpack.c.bf16 %v1294, %v1292
      %v1341 = vpack.c.bf16 %v1297, %v1295
      %v1342 = vpack.c.bf16 %v1298, %v1296
      %v1343 = vpack.c.bf16 %v1301, %v1299
      %v1344 = vpack.c.bf16 %v1302, %v1300
      %v1345 = vpack.c.bf16 %v1305, %v1303
      %v1346 = vpack.c.bf16 %v1306, %v1304
      %v1347 = vpack.c.bf16 %v1309, %v1307
      %v1348 = vpack.c.bf16 %v1310, %v1308
      %v1349 = vpack.c.bf16 %v1313, %v1311
      %v1350 = vpack.c.bf16 %v1314, %v1312
      %v1351 = vpack.c.bf16 %v1317, %v1315
      %v1352 = vpack.c.bf16 %v1318, %v1316
      %v1353 = vpack.c.bf16 %v1321, %v1319
      %v1354 = vpack.c.bf16 %v1322, %v1320
      %v1355 = vld [vmem:[%s5] sm:$0xf]
      %v1356 = vld [vmem:[%s5 + $0x4] sm:$0xf]
      %v1357 = vld [vmem:[%s5 + $0x8] sm:$0xf]
      %v1358 = vld [vmem:[%s5 + $0xc] sm:$0xf]
      %v1359 = vld [vmem:[%s5 + $0x10] sm:$0xf]
      %v1360 = vld [vmem:[%s5 + $0x14] sm:$0xf]
      %v1361 = vld [vmem:[%s5 + $0x18] sm:$0xf]
      %v1362 = vld [vmem:[%s5 + $0x1c] sm:$0xf]
      %v1363 = vld [vmem:[%s5 + $0x20] sm:$0xf]
      %v1364 = vld [vmem:[%s5 + $0x24] sm:$0xf]
      %v1365 = vld [vmem:[%s5 + $0x28] sm:$0xf]
      %v1366 = vld [vmem:[%s5 + $0x2c] sm:$0xf]
      %v1367 = vld [vmem:[%s5 + $0x30] sm:$0xf]
      %v1368 = vld [vmem:[%s5 + $0x34] sm:$0xf]
      %v1369 = vld [vmem:[%s5 + $0x38] sm:$0xf]
      %v1370 = vld [vmem:[%s5 + $0x3c] sm:$0xf]
      %v1371 = vld [vmem:[%s5 + $0x40] sm:$0xf]
      %v1372 = vld [vmem:[%s5 + $0x44] sm:$0xf]
      %v1373 = vld [vmem:[%s5 + $0x48] sm:$0xf]
      %v1374 = vld [vmem:[%s5 + $0x4c] sm:$0xf]
      %v1375 = vld [vmem:[%s5 + $0x50] sm:$0xf]
      %v1376 = vld [vmem:[%s5 + $0x54] sm:$0xf]
      %v1377 = vld [vmem:[%s5 + $0x58] sm:$0xf]
      %v1378 = vld [vmem:[%s5 + $0x5c] sm:$0xf]
      %v1379 = vld [vmem:[%s5 + $0x60] sm:$0xf]
      %v1380 = vld [vmem:[%s5 + $0x64] sm:$0xf]
      %v1381 = vld [vmem:[%s5 + $0x68] sm:$0xf]
      %v1382 = vld [vmem:[%s5 + $0x6c] sm:$0xf]
      %v1383 = vld [vmem:[%s5 + $0x70] sm:$0xf]
      %v1384 = vld [vmem:[%s5 + $0x74] sm:$0xf]
      %v1385 = vld [vmem:[%s5 + $0x78] sm:$0xf]
      %v1386 = vld [vmem:[%s5 + $0x7c] sm:$0xf]
      %v1387 = vld [vmem:[%s6] sm:$0x1]
      %v1389 = vlaneseq
      %v1390 = vshrl.u32 %v1389, 7
      %v1391 = vsub.s32 0, %v1390
      %v1392 = vrot.slane %v1387, %v1391
      %v1426 = vunpack.c.l.b16 %v1355
      %v1427 = vunpack.c.l.b16 %v1356
      %v1428 = vunpack.c.l.b16 %v1357
      %v1429 = vunpack.c.l.b16 %v1358
      %v1430 = vunpack.c.l.b16 %v1359
      %v1431 = vunpack.c.l.b16 %v1360
      %v1432 = vunpack.c.l.b16 %v1361
      %v1433 = vunpack.c.l.b16 %v1362
      %v1434 = vunpack.c.l.b16 %v1363
      %v1435 = vunpack.c.l.b16 %v1364
      %v1436 = vunpack.c.l.b16 %v1365
      %v1437 = vunpack.c.l.b16 %v1366
      %v1438 = vunpack.c.l.b16 %v1367
      %v1439 = vunpack.c.l.b16 %v1368
      %v1440 = vunpack.c.l.b16 %v1369
      %v1441 = vunpack.c.l.b16 %v1370
      %v1442 = vunpack.c.l.b16 %v1371
      %v1443 = vunpack.c.l.b16 %v1372
      %v1444 = vunpack.c.l.b16 %v1373
      %v1445 = vunpack.c.l.b16 %v1374
      %v1446 = vunpack.c.l.b16 %v1375
      %v1447 = vunpack.c.l.b16 %v1376
      %v1448 = vunpack.c.l.b16 %v1377
      %v1449 = vunpack.c.l.b16 %v1378
      %v1450 = vunpack.c.l.b16 %v1379
      %v1451 = vunpack.c.l.b16 %v1380
      %v1452 = vunpack.c.l.b16 %v1381
      %v1453 = vunpack.c.l.b16 %v1382
      %v1454 = vunpack.c.l.b16 %v1383
      %v1455 = vunpack.c.l.b16 %v1384
      %v1456 = vunpack.c.l.b16 %v1385
      %v1457 = vunpack.c.l.b16 %v1386
      %v1458 = vpack.c.b16 %v1427, %v1426
      %v1459 = vpack.c.b16 %v1429, %v1428
      %v1460 = vpack.c.b16 %v1431, %v1430
      %v1461 = vpack.c.b16 %v1433, %v1432
      %v1462 = vpack.c.b16 %v1435, %v1434
      %v1463 = vpack.c.b16 %v1437, %v1436
      %v1464 = vpack.c.b16 %v1439, %v1438
      %v1465 = vpack.c.b16 %v1441, %v1440
      %v1466 = vpack.c.b16 %v1443, %v1442
      %v1467 = vpack.c.b16 %v1445, %v1444
      %v1468 = vpack.c.b16 %v1447, %v1446
      %v1469 = vpack.c.b16 %v1449, %v1448
      %v1470 = vpack.c.b16 %v1451, %v1450
      %v1471 = vpack.c.b16 %v1453, %v1452
      %v1472 = vpack.c.b16 %v1455, %v1454
      %v1473 = vpack.c.b16 %v1457, %v1456
      %1490 = vmatprep.subr.bf16.mxu0 0
      %1491 = vmatpush1.bf16.msra.mxu0 %v1458
      %1492 = vmatprep.subr.bf16.mxu0 0
      %1493 = vmatpush1.bf16.msra.mxu0 %v1459
      %1494 = vmatprep.subr.bf16.mxu0 0
      %1495 = vmatpush1.bf16.msra.mxu0 %v1460
      %1496 = vmatprep.subr.bf16.mxu0 0
      %1497 = vmatpush1.bf16.msra.mxu0 %v1461
      %1498 = vmatprep.subr.bf16.mxu0 0
      %1499 = vmatpush1.bf16.msra.mxu0 %v1462
      %1500 = vmatprep.subr.bf16.mxu0 0
      %1501 = vmatpush1.bf16.msra.mxu0 %v1463
      %1502 = vmatprep.subr.bf16.mxu0 0
      %1503 = vmatpush1.bf16.msra.mxu0 %v1464
      %1504 = vmatprep.subr.bf16.mxu0 0
      %1505 = vmatpush1.bf16.msra.mxu0 %v1465
      %1506 = vmatprep.subr.bf16.mxu0 0
      %1507 = vmatpush1.bf16.msra.mxu0 %v1466
      %1508 = vmatprep.subr.bf16.mxu0 0
      %1509 = vmatpush1.bf16.msra.mxu0 %v1467
      %1510 = vmatprep.subr.bf16.mxu0 0
      %1511 = vmatpush1.bf16.msra.mxu0 %v1468
      %1512 = vmatprep.subr.bf16.mxu0 0
      %1513 = vmatpush1.bf16.msra.mxu0 %v1469
      %1514 = vmatprep.subr.bf16.mxu0 0
      %1515 = vmatpush1.bf16.msra.mxu0 %v1470
      %1516 = vmatprep.subr.bf16.mxu0 0
      %1517 = vmatpush1.bf16.msra.mxu0 %v1471
      %1518 = vmatprep.subr.bf16.mxu0 0
      %1519 = vmatpush1.bf16.msra.mxu0 %v1472
      %1520 = vmatprep.subr.bf16.mxu0 0
      %1521 = vmatpush1.bf16.msra.mxu0 %v1473
      %1522 = vmatprep.mubr.bf16.mxu0 %v1324
      %1523 = vmatmul.mubr.bf16.gmra.mrb[0].mxu0 %v1323
      %v1524 = vpop.f32.mrb[0].mxu0
      %v1525 = vadd.f32 %v1392, %v1524
      %v1526 = vpop.f32.mrb[0].mxu0
      %v1527 = vpop.f32.mrb[0].mxu0
      %v1528 = vadd.f32 %v1392, %v1527
      %v1529 = vpop.f32.mrb[0].mxu0
      %1530 = vmatprep.mubr.bf16.mxu0 %v1326
      %1531 = vmatmul.mubr.bf16.gmra.mrb[0].mxu0 %v1325
      %v1532 = vpop.f32.mrb[0].mxu0
      %v1533 = vadd.f32 %v1392, %v1532
      %v1534 = vpop.f32.mrb[0].mxu0
      %v1535 = vpop.f32.mrb[0].mxu0
      %v1536 = vadd.f32 %v1392, %v1535
      %v1537 = vpop.f32.mrb[0].mxu0
      %1538 = vmatprep.mubr.bf16.mxu0 %v1328
      %1539 = vmatmul.mubr.bf16.gmra.mrb[0].mxu0 %v1327
      %v1540 = vpop.f32.mrb[0].mxu0
      %v1541 = vadd.f32 %v1392, %v1540
      %v1542 = vpop.f32.mrb[0].mxu0
      %v1543 = vpop.f32.mrb[0].mxu0
      %v1544 = vadd.f32 %v1392, %v1543
      %v1545 = vpop.f32.mrb[0].mxu0
      %1546 = vmatprep.mubr.bf16.mxu0 %v1330
      %1547 = vmatmul.mubr.bf16.gmra.mrb[0].mxu0 %v1329
      %v1548 = vpop.f32.mrb[0].mxu0
      %v1549 = vadd.f32 %v1392, %v1548
      %v1550 = vpop.f32.mrb[0].mxu0
      %v1551 = vpop.f32.mrb[0].mxu0
      %v1552 = vadd.f32 %v1392, %v1551
      %v1553 = vpop.f32.mrb[0].mxu0
      %1554 = vmatprep.mubr.bf16.mxu0 %v1332
      %1555 = vmatmul.mubr.bf16.gmra.mrb[0].mxu0 %v1331
      %v1556 = vpop.f32.mrb[0].mxu0
      %v1557 = vadd.f32 %v1392, %v1556
      %v1558 = vpop.f32.mrb[0].mxu0
      %v1559 = vpop.f32.mrb[0].mxu0
      %v1560 = vadd.f32 %v1392, %v1559
      %v1561 = vpop.f32.mrb[0].mxu0
      %1562 = vmatprep.mubr.bf16.mxu0 %v1334
      %1563 = vmatmul.mubr.bf16.gmra.mrb[0].mxu0 %v1333
      %v1564 = vpop.f32.mrb[0].mxu0
      %v1565 = vadd.f32 %v1392, %v1564
      %v1566 = vpop.f32.mrb[0].mxu0
      %v1567 = vpop.f32.mrb[0].mxu0
      %v1568 = vadd.f32 %v1392, %v1567
      %v1569 = vpop.f32.mrb[0].mxu0
      %1570 = vmatprep.mubr.bf16.mxu0 %v1336
      %1571 = vmatmul.mubr.bf16.gmra.mrb[0].mxu0 %v1335
      %v1572 = vpop.f32.mrb[0].mxu0
      %v1573 = vadd.f32 %v1392, %v1572
      %v1574 = vpop.f32.mrb[0].mxu0
      %v1575 = vpop.f32.mrb[0].mxu0
      %v1576 = vadd.f32 %v1392, %v1575
      %v1577 = vpop.f32.mrb[0].mxu0
      %1578 = vmatprep.mubr.bf16.mxu0 %v1338
      %1579 = vmatmul.mubr.bf16.gmra.mrb[0].mxu0 %v1337
      %v1580 = vpop.f32.mrb[0].mxu0
      %v1581 = vadd.f32 %v1392, %v1580
      %v1582 = vpop.f32.mrb[0].mxu0
      %v1583 = vpop.f32.mrb[0].mxu0
      %v1584 = vadd.f32 %v1392, %v1583
      %v1585 = vpop.f32.mrb[0].mxu0
      %1586 = vmatprep.mubr.bf16.mxu0 %v1340
      %1587 = vmatmul.mubr.bf16.gmra.mrb[0].mxu0 %v1339
      %v1588 = vpop.f32.mrb[0].mxu0
      %v1589 = vadd.f32 %v1392, %v1588
      %v1590 = vpop.f32.mrb[0].mxu0
      %v1591 = vpop.f32.mrb[0].mxu0
      %v1592 = vadd.f32 %v1392, %v1591
      %v1593 = vpop.f32.mrb[0].mxu0
      %1594 = vmatprep.mubr.bf16.mxu0 %v1342
      %1595 = vmatmul.mubr.bf16.gmra.mrb[0].mxu0 %v1341
      %v1596 = vpop.f32.mrb[0].mxu0
      %v1597 = vadd.f32 %v1392, %v1596
      %v1598 = vpop.f32.mrb[0].mxu0
      %v1599 = vpop.f32.mrb[0].mxu0
      %v1600 = vadd.f32 %v1392, %v1599
      %v1601 = vpop.f32.mrb[0].mxu0
      %1602 = vmatprep.mubr.bf16.mxu0 %v1344
      %1603 = vmatmul.mubr.bf16.gmra.mrb[0].mxu0 %v1343
      %v1604 = vpop.f32.mrb[0].mxu0
      %v1605 = vadd.f32 %v1392, %v1604
      %v1606 = vpop.f32.mrb[0].mxu0
      %v1607 = vpop.f32.mrb[0].mxu0
      %v1608 = vadd.f32 %v1392, %v1607
      %v1609 = vpop.f32.mrb[0].mxu0
      %1610 = vmatprep.mubr.bf16.mxu0 %v1346
      %1611 = vmatmul.mubr.bf16.gmra.mrb[0].mxu0 %v1345
      %v1612 = vpop.f32.mrb[0].mxu0
      %v1613 = vadd.f32 %v1392, %v1612
      %v1614 = vpop.f32.mrb[0].mxu0
      %v1615 = vpop.f32.mrb[0].mxu0
      %v1616 = vadd.f32 %v1392, %v1615
      %v1617 = vpop.f32.mrb[0].mxu0
      %1618 = vmatprep.mubr.bf16.mxu0 %v1348
      %1619 = vmatmul.mubr.bf16.gmra.mrb[0].mxu0 %v1347
      %v1620 = vpop.f32.mrb[0].mxu0
      %v1621 = vadd.f32 %v1392, %v1620
      %v1622 = vpop.f32.mrb[0].mxu0
      %v1623 = vpop.f32.mrb[0].mxu0
      %v1624 = vadd.f32 %v1392, %v1623
      %v1625 = vpop.f32.mrb[0].mxu0
      %1626 = vmatprep.mubr.bf16.mxu0 %v1350
      %1627 = vmatmul.mubr.bf16.gmra.mrb[0].mxu0 %v1349
      %v1628 = vpop.f32.mrb[0].mxu0
      %v1629 = vadd.f32 %v1392, %v1628
      %v1630 = vpop.f32.mrb[0].mxu0
      %v1631 = vpop.f32.mrb[0].mxu0
      %v1632 = vadd.f32 %v1392, %v1631
      %v1633 = vpop.f32.mrb[0].mxu0
      %1634 = vmatprep.mubr.bf16.mxu0 %v1352
      %1635 = vmatmul.mubr.bf16.gmra.mrb[0].mxu0 %v1351
      %v1636 = vpop.f32.mrb[0].mxu0
      %v1637 = vadd.f32 %v1392, %v1636
      %v1638 = vpop.f32.mrb[0].mxu0
      %v1639 = vpop.f32.mrb[0].mxu0
      %v1640 = vadd.f32 %v1392, %v1639
      %v1641 = vpop.f32.mrb[0].mxu0
      %1642 = vmatprep.mubr.bf16.mxu0 %v1354
      %1643 = vmatmul.mubr.bf16.gmra.mrb[0].mxu0 %v1353
      %v1644 = vpop.f32.mrb[0].mxu0
      %v1645 = vadd.f32 %v1392, %v1644
      %v1646 = vpop.f32.mrb[0].mxu0
      %v1647 = vpop.f32.mrb[0].mxu0
      %v1648 = vadd.f32 %v1392, %v1647
      %v1649 = vpop.f32.mrb[0].mxu0
      %1650 = vdwg.mxu0
      %v1651 = vmax.f32 %v1525, 0.0
      %v1652 = vmax.f32 %v1528, 0.0
      %v1653 = vmax.f32 %v1533, 0.0
      %v1654 = vmax.f32 %v1536, 0.0
      %v1655 = vmax.f32 %v1541, 0.0
      %v1656 = vmax.f32 %v1544, 0.0
      %v1657 = vmax.f32 %v1549, 0.0
      %v1658 = vmax.f32 %v1552, 0.0
      %v1659 = vmax.f32 %v1557, 0.0
      %v1660 = vmax.f32 %v1560, 0.0
      %v1661 = vmax.f32 %v1565, 0.0
      %v1662 = vmax.f32 %v1568, 0.0
      %v1663 = vmax.f32 %v1573, 0.0
      %v1664 = vmax.f32 %v1576, 0.0
      %v1665 = vmax.f32 %v1581, 0.0
      %v1666 = vmax.f32 %v1584, 0.0
      %v1667 = vmax.f32 %v1589, 0.0
      %v1668 = vmax.f32 %v1592, 0.0
      %v1669 = vmax.f32 %v1597, 0.0
      %v1670 = vmax.f32 %v1600, 0.0
      %v1671 = vmax.f32 %v1605, 0.0
      %v1672 = vmax.f32 %v1608, 0.0
      %v1673 = vmax.f32 %v1613, 0.0
      %v1674 = vmax.f32 %v1616, 0.0
      %v1675 = vmax.f32 %v1621, 0.0
      %v1676 = vmax.f32 %v1624, 0.0
      %v1677 = vmax.f32 %v1629, 0.0
      %v1678 = vmax.f32 %v1632, 0.0
      %v1679 = vmax.f32 %v1637, 0.0
      %v1680 = vmax.f32 %v1640, 0.0
      %v1681 = vmax.f32 %v1645, 0.0
      %v1682 = vmax.f32 %v1648, 0.0
      %v1683 = vpack.c.bf16 %v1652, %v1651
      %v1684 = vpack.c.bf16 %v1654, %v1653
      %v1685 = vpack.c.bf16 %v1656, %v1655
      %v1686 = vpack.c.bf16 %v1658, %v1657
      %v1687 = vpack.c.bf16 %v1660, %v1659
      %v1688 = vpack.c.bf16 %v1662, %v1661
      %v1689 = vpack.c.bf16 %v1664, %v1663
      %v1690 = vpack.c.bf16 %v1666, %v1665
      %v1691 = vpack.c.bf16 %v1668, %v1667
      %v1692 = vpack.c.bf16 %v1670, %v1669
      %v1693 = vpack.c.bf16 %v1672, %v1671
      %v1694 = vpack.c.bf16 %v1674, %v1673
      %v1695 = vpack.c.bf16 %v1676, %v1675
      %v1696 = vpack.c.bf16 %v1678, %v1677
      %v1697 = vpack.c.bf16 %v1680, %v1679
      %v1698 = vpack.c.bf16 %v1682, %v1681
      %v1699 = vld [vmem:[%s7] sm:$0xf]
      %v1700 = vld [vmem:[%s7 + $0x4] sm:$0xf]
      %v1701 = vld [vmem:[%s7 + $0x8] sm:$0xf]
      %v1702 = vld [vmem:[%s7 + $0xc] sm:$0xf]
      %v1703 = vld [vmem:[%s7 + $0x10] sm:$0xf]
      %v1704 = vld [vmem:[%s7 + $0x14] sm:$0xf]
      %v1705 = vld [vmem:[%s7 + $0x18] sm:$0xf]
      %v1706 = vld [vmem:[%s7 + $0x1c] sm:$0xf]
      %v1707 = vld [vmem:[%s7 + $0x20] sm:$0xf]
      %v1708 = vld [vmem:[%s7 + $0x24] sm:$0xf]
      %v1709 = vld [vmem:[%s7 + $0x28] sm:$0xf]
      %v1710 = vld [vmem:[%s7 + $0x2c] sm:$0xf]
      %v1711 = vld [vmem:[%s7 + $0x30] sm:$0xf]
      %v1712 = vld [vmem:[%s7 + $0x34] sm:$0xf]
      %v1713 = vld [vmem:[%s7 + $0x38] sm:$0xf]
      %v1714 = vld [vmem:[%s7 + $0x3c] sm:$0xf]
      %v1715 = vld [vmem:[%s8] sm:$0x1]
      %v1717 = vlaneseq
      %v1718 = vshrl.u32 %v1717, 7
      %v1719 = vsub.s32 0, %v1718
      %v1720 = vrot.slane %v1715, %v1719
      %v1738 = vunpack.c.l.b16 %v1699
      %v1739 = vunpack.c.l.b16 %v1700
      %v1740 = vunpack.c.l.b16 %v1701
      %v1741 = vunpack.c.l.b16 %v1702
      %v1742 = vunpack.c.l.b16 %v1703
      %v1743 = vunpack.c.l.b16 %v1704
      %v1744 = vunpack.c.l.b16 %v1705
      %v1745 = vunpack.c.l.b16 %v1706
      %v1746 = vunpack.c.l.b16 %v1707
      %v1747 = vunpack.c.l.b16 %v1708
      %v1748 = vunpack.c.l.b16 %v1709
      %v1749 = vunpack.c.l.b16 %v1710
      %v1750 = vunpack.c.l.b16 %v1711
      %v1751 = vunpack.c.l.b16 %v1712
      %v1752 = vunpack.c.l.b16 %v1713
      %v1753 = vunpack.c.l.b16 %v1714
      %v1754 = vpack.c.b16 %v1739, %v1738
      %v1755 = vpack.c.b16 %v1741, %v1740
      %v1756 = vpack.c.b16 %v1743, %v1742
      %v1757 = vpack.c.b16 %v1745, %v1744
      %v1758 = vpack.c.b16 %v1747, %v1746
      %v1759 = vpack.c.b16 %v1749, %v1748
      %v1760 = vpack.c.b16 %v1751, %v1750
      %v1761 = vpack.c.b16 %v1753, %v1752
      %1770 = vmatprep.subr.bf16.mxu0 0
      %1771 = vmatpush1.bf16.msra.mxu0 %v1754
      %1772 = vmatprep.subr.bf16.mxu0 0
      %1773 = vmatpush1.bf16.msra.mxu0 %v1755
      %1774 = vmatprep.subr.bf16.mxu0 0
      %1775 = vmatpush1.bf16.msra.mxu0 %v1756
      %1776 = vmatprep.subr.bf16.mxu0 0
      %1777 = vmatpush1.bf16.msra.mxu0 %v1757
      %1778 = vmatprep.subr.bf16.mxu0 0
      %1779 = vmatpush1.bf16.msra.mxu0 %v1758
      %1780 = vmatprep.subr.bf16.mxu0 0
      %1781 = vmatpush1.bf16.msra.mxu0 %v1759
      %1782 = vmatprep.subr.bf16.mxu0 0
      %1783 = vmatpush1.bf16.msra.mxu0 %v1760
      %1784 = vmatprep.subr.bf16.mxu0 0
      %1785 = vmatpush1.bf16.msra.mxu0 %v1761
      %1786 = vmatprep.subr.bf16.mxu0 0
      %1787 = vmatpush1.bf16.msra.mxu0 0
      %1788 = vmatprep.subr.bf16.mxu0 0
      %1789 = vmatpush1.bf16.msra.mxu0 0
      %1790 = vmatprep.subr.bf16.mxu0 0
      %1791 = vmatpush1.bf16.msra.mxu0 0
      %1792 = vmatprep.subr.bf16.mxu0 0
      %1793 = vmatpush1.bf16.msra.mxu0 0
      %1794 = vmatprep.subr.bf16.mxu0 0
      %1795 = vmatpush1.bf16.msra.mxu0 0
      %1796 = vmatprep.subr.bf16.mxu0 0
      %1797 = vmatpush1.bf16.msra.mxu0 0
      %1798 = vmatprep.subr.bf16.mxu0 0
      %1799 = vmatpush1.bf16.msra.mxu0 0
      %1800 = vmatprep.subr.bf16.mxu0 0
      %1801 = vmatpush1.bf16.msra.mxu0 0
      %1802 = vmatprep.mubr.bf16.mxu0 0
      %1803 = vmatmul.mubr.bf16.gmra.mrb[0].mxu0 %v1683
      %v1804 = vpop.f32.mrb[0].mxu0
      %v1805 = vadd.f32 %v1720, %v1804
      %v1806 = vpop.f32.mrb[0].mxu0
      %v1807 = vpop.f32.mrb[0].mxu0
      %v1808 = vadd.f32 %v1720, %v1807
      %v1809 = vpop.f32.mrb[0].mxu0
      %1810 = vmatprep.mubr.bf16.mxu0 0
      %1811 = vmatmul.mubr.bf16.gmra.mrb[0].mxu0 %v1684
      %v1812 = vpop.f32.mrb[0].mxu0
      %v1813 = vadd.f32 %v1720, %v1812
      %v1814 = vpop.f32.mrb[0].mxu0
      %v1815 = vpop.f32.mrb[0].mxu0
      %v1816 = vadd.f32 %v1720, %v1815
      %v1817 = vpop.f32.mrb[0].mxu0
      %1818 = vmatprep.mubr.bf16.mxu0 0
      %1819 = vmatmul.mubr.bf16.gmra.mrb[0].mxu0 %v1685
      %v1820 = vpop.f32.mrb[0].mxu0
      %v1821 = vadd.f32 %v1720, %v1820
      %v1822 = vpop.f32.mrb[0].mxu0
      %v1823 = vpop.f32.mrb[0].mxu0
      %v1824 = vadd.f32 %v1720, %v1823
      %v1825 = vpop.f32.mrb[0].mxu0
      %1826 = vmatprep.mubr.bf16.mxu0 0
      %1827 = vmatmul.mubr.bf16.gmra.mrb[0].mxu0 %v1686
      %v1828 = vpop.f32.mrb[0].mxu0
      %v1829 = vadd.f32 %v1720, %v1828
      %v1830 = vpop.f32.mrb[0].mxu0
      %v1831 = vpop.f32.mrb[0].mxu0
      %v1832 = vadd.f32 %v1720, %v1831
      %v1833 = vpop.f32.mrb[0].mxu0
      %1834 = vmatprep.mubr.bf16.mxu0 0
      %1835 = vmatmul.mubr.bf16.gmra.mrb[0].mxu0 %v1687
      %v1836 = vpop.f32.mrb[0].mxu0
      %v1837 = vadd.f32 %v1720, %v1836
      %v1838 = vpop.f32.mrb[0].mxu0
      %v1839 = vpop.f32.mrb[0].mxu0
      %v1840 = vadd.f32 %v1720, %v1839
      %v1841 = vpop.f32.mrb[0].mxu0
      %1842 = vmatprep.mubr.bf16.mxu0 0
      %1843 = vmatmul.mubr.bf16.gmra.mrb[0].mxu0 %v1688
      %v1844 = vpop.f32.mrb[0].mxu0
      %v1845 = vadd.f32 %v1720, %v1844
      %v1846 = vpop.f32.mrb[0].mxu0
      %v1847 = vpop.f32.mrb[0].mxu0
      %v1848 = vadd.f32 %v1720, %v1847
      %v1849 = vpop.f32.mrb[0].mxu0
      %1850 = vmatprep.mubr.bf16.mxu0 0
      %1851 = vmatmul.mubr.bf16.gmra.mrb[0].mxu0 %v1689
      %v1852 = vpop.f32.mrb[0].mxu0
      %v1853 = vadd.f32 %v1720, %v1852
      %v1854 = vpop.f32.mrb[0].mxu0
      %v1855 = vpop.f32.mrb[0].mxu0
      %v1856 = vadd.f32 %v1720, %v1855
      %v1857 = vpop.f32.mrb[0].mxu0
      %1858 = vmatprep.mubr.bf16.mxu0 0
      %1859 = vmatmul.mubr.bf16.gmra.mrb[0].mxu0 %v1690
      %v1860 = vpop.f32.mrb[0].mxu0
      %v1861 = vadd.f32 %v1720, %v1860
      %v1862 = vpop.f32.mrb[0].mxu0
      %v1863 = vpop.f32.mrb[0].mxu0
      %v1864 = vadd.f32 %v1720, %v1863
      %v1865 = vpop.f32.mrb[0].mxu0
      %1866 = vmatprep.mubr.bf16.mxu0 0
      %1867 = vmatmul.mubr.bf16.gmra.mrb[0].mxu0 %v1691
      %v1868 = vpop.f32.mrb[0].mxu0
      %v1869 = vadd.f32 %v1720, %v1868
      %v1870 = vpop.f32.mrb[0].mxu0
      %v1871 = vpop.f32.mrb[0].mxu0
      %v1872 = vadd.f32 %v1720, %v1871
      %v1873 = vpop.f32.mrb[0].mxu0
      %1874 = vmatprep.mubr.bf16.mxu0 0
      %1875 = vmatmul.mubr.bf16.gmra.mrb[0].mxu0 %v1692
      %v1876 = vpop.f32.mrb[0].mxu0
      %v1877 = vadd.f32 %v1720, %v1876
      %v1878 = vpop.f32.mrb[0].mxu0
      %v1879 = vpop.f32.mrb[0].mxu0
      %v1880 = vadd.f32 %v1720, %v1879
      %v1881 = vpop.f32.mrb[0].mxu0
      %1882 = vmatprep.mubr.bf16.mxu0 0
      %1883 = vmatmul.mubr.bf16.gmra.mrb[0].mxu0 %v1693
      %v1884 = vpop.f32.mrb[0].mxu0
      %v1885 = vadd.f32 %v1720, %v1884
      %v1886 = vpop.f32.mrb[0].mxu0
      %v1887 = vpop.f32.mrb[0].mxu0
      %v1888 = vadd.f32 %v1720, %v1887
      %v1889 = vpop.f32.mrb[0].mxu0
      %1890 = vmatprep.mubr.bf16.mxu0 0
      %1891 = vmatmul.mubr.bf16.gmra.mrb[0].mxu0 %v1694
      %v1892 = vpop.f32.mrb[0].mxu0
      %v1893 = vadd.f32 %v1720, %v1892
      %v1894 = vpop.f32.mrb[0].mxu0
      %v1895 = vpop.f32.mrb[0].mxu0
      %v1896 = vadd.f32 %v1720, %v1895
      %v1897 = vpop.f32.mrb[0].mxu0
      %1898 = vmatprep.mubr.bf16.mxu0 0
      %1899 = vmatmul.mubr.bf16.gmra.mrb[0].mxu0 %v1695
      %v1900 = vpop.f32.mrb[0].mxu0
      %v1901 = vadd.f32 %v1720, %v1900
      %v1902 = vpop.f32.mrb[0].mxu0
      %v1903 = vpop.f32.mrb[0].mxu0
      %v1904 = vadd.f32 %v1720, %v1903
      %v1905 = vpop.f32.mrb[0].mxu0
      %1906 = vmatprep.mubr.bf16.mxu0 0
      %1907 = vmatmul.mubr.bf16.gmra.mrb[0].mxu0 %v1696
      %v1908 = vpop.f32.mrb[0].mxu0
      %v1909 = vadd.f32 %v1720, %v1908
      %v1910 = vpop.f32.mrb[0].mxu0
      %v1911 = vpop.f32.mrb[0].mxu0
      %v1912 = vadd.f32 %v1720, %v1911
      %v1913 = vpop.f32.mrb[0].mxu0
      %1914 = vmatprep.mubr.bf16.mxu0 0
      %1915 = vmatmul.mubr.bf16.gmra.mrb[0].mxu0 %v1697
      %v1916 = vpop.f32.mrb[0].mxu0
      %v1917 = vadd.f32 %v1720, %v1916
      %v1918 = vpop.f32.mrb[0].mxu0
      %v1919 = vpop.f32.mrb[0].mxu0
      %v1920 = vadd.f32 %v1720, %v1919
      %v1921 = vpop.f32.mrb[0].mxu0
      %1922 = vmatprep.mubr.bf16.mxu0 0
      %1923 = vmatmul.mubr.bf16.gmra.mrb[0].mxu0 %v1698
      %v1924 = vpop.f32.mrb[0].mxu0
      %v1925 = vadd.f32 %v1720, %v1924
      %v1926 = vpop.f32.mrb[0].mxu0
      %v1927 = vpop.f32.mrb[0].mxu0
      %v1928 = vadd.f32 %v1720, %v1927
      %v1929 = vpop.f32.mrb[0].mxu0
      %1930 = vdwg.mxu0
      %v1931 = vxor.u32 %v1805, 2147483648
      %v1932 = vxor.u32 %v1808, 2147483648
      %v1933 = vxor.u32 %v1813, 2147483648
      %v1934 = vxor.u32 %v1816, 2147483648
      %v1935 = vxor.u32 %v1821, 2147483648
      %v1936 = vxor.u32 %v1824, 2147483648
      %v1937 = vxor.u32 %v1829, 2147483648
      %v1938 = vxor.u32 %v1832, 2147483648
      %v1939 = vxor.u32 %v1837, 2147483648
      %v1940 = vxor.u32 %v1840, 2147483648
      %v1941 = vxor.u32 %v1845, 2147483648
      %v1942 = vxor.u32 %v1848, 2147483648
      %v1943 = vxor.u32 %v1853, 2147483648
      %v1944 = vxor.u32 %v1856, 2147483648
      %v1945 = vxor.u32 %v1861, 2147483648
      %v1946 = vxor.u32 %v1864, 2147483648
      %v1947 = vxor.u32 %v1869, 2147483648
      %v1948 = vxor.u32 %v1872, 2147483648
      %v1949 = vxor.u32 %v1877, 2147483648
      %v1950 = vxor.u32 %v1880, 2147483648
      %v1951 = vxor.u32 %v1885, 2147483648
      %v1952 = vxor.u32 %v1888, 2147483648
      %v1953 = vxor.u32 %v1893, 2147483648
      %v1954 = vxor.u32 %v1896, 2147483648
      %v1955 = vxor.u32 %v1901, 2147483648
      %v1956 = vxor.u32 %v1904, 2147483648
      %v1957 = vxor.u32 %v1909, 2147483648
      %v1958 = vxor.u32 %v1912, 2147483648
      %v1959 = vxor.u32 %v1917, 2147483648
      %v1960 = vxor.u32 %v1920, 2147483648
      %v1961 = vxor.u32 %v1925, 2147483648
      %v1962 = vxor.u32 %v1928, 2147483648
      %v1963 = vmul.f32 %v1931, 1.442695
      %v1964 = vpow.pop %v1963
      %v1965 = vmul.f32 %v1932, 1.442695
      %v1966 = vpow.pop %v1965
      %v1967 = vmul.f32 %v1933, 1.442695
      %v1968 = vpow.pop %v1967
      %v1969 = vmul.f32 %v1934, 1.442695
      %v1970 = vpow.pop %v1969
      %v1971 = vmul.f32 %v1935, 1.442695
      %v1972 = vpow.pop %v1971
      %v1973 = vmul.f32 %v1936, 1.442695
      %v1974 = vpow.pop %v1973
      %v1975 = vmul.f32 %v1937, 1.442695
      %v1976 = vpow.pop %v1975
      %v1977 = vmul.f32 %v1938, 1.442695
      %v1978 = vpow.pop %v1977
      %v1979 = vmul.f32 %v1939, 1.442695
      %v1980 = vpow.pop %v1979
      %v1981 = vmul.f32 %v1940, 1.442695
      %v1982 = vpow.pop %v1981
      %v1983 = vmul.f32 %v1941, 1.442695
      %v1984 = vpow.pop %v1983
      %v1985 = vmul.f32 %v1942, 1.442695
      %v1986 = vpow.pop %v1985
      %v1987 = vmul.f32 %v1943, 1.442695
      %v1988 = vpow.pop %v1987
      %v1989 = vmul.f32 %v1944, 1.442695
      %v1990 = vpow.pop %v1989
      %v1991 = vmul.f32 %v1945, 1.442695
      %v1992 = vpow.pop %v1991
      %v1993 = vmul.f32 %v1946, 1.442695
      %v1994 = vpow.pop %v1993
      %v1995 = vmul.f32 %v1947, 1.442695
      %v1996 = vpow.pop %v1995
      %v1997 = vmul.f32 %v1948, 1.442695
      %v1998 = vpow.pop %v1997
      %v1999 = vmul.f32 %v1949, 1.442695
      %v2000 = vpow.pop %v1999
      %v2001 = vmul.f32 %v1950, 1.442695
      %v2002 = vpow.pop %v2001
      %v2003 = vmul.f32 %v1951, 1.442695
      %v2004 = vpow.pop %v2003
      %v2005 = vmul.f32 %v1952, 1.442695
      %v2006 = vpow.pop %v2005
      %v2007 = vmul.f32 %v1953, 1.442695
      %v2008 = vpow.pop %v2007
      %v2009 = vmul.f32 %v1954, 1.442695
      %v2010 = vpow.pop %v2009
      %v2011 = vmul.f32 %v1955, 1.442695
      %v2012 = vpow.pop %v2011
      %v2013 = vmul.f32 %v1956, 1.442695
      %v2014 = vpow.pop %v2013
      %v2015 = vmul.f32 %v1957, 1.442695
      %v2016 = vpow.pop %v2015
      %v2017 = vmul.f32 %v1958, 1.442695
      %v2018 = vpow.pop %v2017
      %v2019 = vmul.f32 %v1959, 1.442695
      %v2020 = vpow.pop %v2019
      %v2021 = vmul.f32 %v1960, 1.442695
      %v2022 = vpow.pop %v2021
      %v2023 = vmul.f32 %v1961, 1.442695
      %v2024 = vpow.pop %v2023
      %v2025 = vmul.f32 %v1962, 1.442695
      %v2026 = vpow.pop %v2025
      %v2027 = vadd.f32 %v1964, 1.0
      %v2028 = vadd.f32 %v1966, 1.0
      %v2029 = vadd.f32 %v1968, 1.0
      %v2030 = vadd.f32 %v1970, 1.0
      %v2031 = vadd.f32 %v1972, 1.0
      %v2032 = vadd.f32 %v1974, 1.0
      %v2033 = vadd.f32 %v1976, 1.0
      %v2034 = vadd.f32 %v1978, 1.0
      %v2035 = vadd.f32 %v1980, 1.0
      %v2036 = vadd.f32 %v1982, 1.0
      %v2037 = vadd.f32 %v1984, 1.0
      %v2038 = vadd.f32 %v1986, 1.0
      %v2039 = vadd.f32 %v1988, 1.0
      %v2040 = vadd.f32 %v1990, 1.0
      %v2041 = vadd.f32 %v1992, 1.0
      %v2042 = vadd.f32 %v1994, 1.0
      %v2043 = vadd.f32 %v1996, 1.0
      %v2044 = vadd.f32 %v1998, 1.0
      %v2045 = vadd.f32 %v2000, 1.0
      %v2046 = vadd.f32 %v2002, 1.0
      %v2047 = vadd.f32 %v2004, 1.0
      %v2048 = vadd.f32 %v2006, 1.0
      %v2049 = vadd.f32 %v2008, 1.0
      %v2050 = vadd.f32 %v2010, 1.0
      %v2051 = vadd.f32 %v2012, 1.0
      %v2052 = vadd.f32 %v2014, 1.0
      %v2053 = vadd.f32 %v2016, 1.0
      %v2054 = vadd.f32 %v2018, 1.0
      %v2055 = vadd.f32 %v2020, 1.0
      %v2056 = vadd.f32 %v2022, 1.0
      %v2057 = vadd.f32 %v2024, 1.0
      %v2058 = vadd.f32 %v2026, 1.0
      %v2059 = vrcp.pop %v2027
      %v2060 = vmul.f32 1.0, %v2059
      %v2061 = vrcp.pop %v2028
      %v2062 = vmul.f32 1.0, %v2061
      %v2063 = vrcp.pop %v2029
      %v2064 = vmul.f32 1.0, %v2063
      %v2065 = vrcp.pop %v2030
      %v2066 = vmul.f32 1.0, %v2065
      %v2067 = vrcp.pop %v2031
      %v2068 = vmul.f32 1.0, %v2067
      %v2069 = vrcp.pop %v2032
      %v2070 = vmul.f32 1.0, %v2069
      %v2071 = vrcp.pop %v2033
      %v2072 = vmul.f32 1.0, %v2071
      %v2073 = vrcp.pop %v2034
      %v2074 = vmul.f32 1.0, %v2073
      %v2075 = vrcp.pop %v2035
      %v2076 = vmul.f32 1.0, %v2075
      %v2077 = vrcp.pop %v2036
      %v2078 = vmul.f32 1.0, %v2077
      %v2079 = vrcp.pop %v2037
      %v2080 = vmul.f32 1.0, %v2079
      %v2081 = vrcp.pop %v2038
      %v2082 = vmul.f32 1.0, %v2081
      %v2083 = vrcp.pop %v2039
      %v2084 = vmul.f32 1.0, %v2083
      %v2085 = vrcp.pop %v2040
      %v2086 = vmul.f32 1.0, %v2085
      %v2087 = vrcp.pop %v2041
      %v2088 = vmul.f32 1.0, %v2087
      %v2089 = vrcp.pop %v2042
      %v2090 = vmul.f32 1.0, %v2089
      %v2091 = vrcp.pop %v2043
      %v2092 = vmul.f32 1.0, %v2091
      %v2093 = vrcp.pop %v2044
      %v2094 = vmul.f32 1.0, %v2093
      %v2095 = vrcp.pop %v2045
      %v2096 = vmul.f32 1.0, %v2095
      %v2097 = vrcp.pop %v2046
      %v2098 = vmul.f32 1.0, %v2097
      %v2099 = vrcp.pop %v2047
      %v2100 = vmul.f32 1.0, %v2099
      %v2101 = vrcp.pop %v2048
      %v2102 = vmul.f32 1.0, %v2101
      %v2103 = vrcp.pop %v2049
      %v2104 = vmul.f32 1.0, %v2103
      %v2105 = vrcp.pop %v2050
      %v2106 = vmul.f32 1.0, %v2105
      %v2107 = vrcp.pop %v2051
      %v2108 = vmul.f32 1.0, %v2107
      %v2109 = vrcp.pop %v2052
      %v2110 = vmul.f32 1.0, %v2109
      %v2111 = vrcp.pop %v2053
      %v2112 = vmul.f32 1.0, %v2111
      %v2113 = vrcp.pop %v2054
      %v2114 = vmul.f32 1.0, %v2113
      %v2115 = vrcp.pop %v2055
      %v2116 = vmul.f32 1.0, %v2115
      %v2117 = vrcp.pop %v2056
      %v2118 = vmul.f32 1.0, %v2117
      %v2119 = vrcp.pop %v2057
      %v2120 = vmul.f32 1.0, %v2119
      %v2121 = vrcp.pop %v2058
      %v2122 = vmul.f32 1.0, %v2121
      %2123 = vst [vmem:[%s334] sm:$0xff] %v2060
      %2124 = vst [vmem:[%s334 + $0x8] sm:$0xff] %v2062
      %2125 = vst [vmem:[%s334 + $0x10] sm:$0xff] %v2064
      %2126 = vst [vmem:[%s334 + $0x18] sm:$0xff] %v2066
      %2127 = vst [vmem:[%s334 + $0x20] sm:$0xff] %v2068
      %2128 = vst [vmem:[%s334 + $0x28] sm:$0xff] %v2070
      %2129 = vst [vmem:[%s334 + $0x30] sm:$0xff] %v2072
      %2130 = vst [vmem:[%s334 + $0x38] sm:$0xff] %v2074
      %2131 = vst [vmem:[%s334 + $0x40] sm:$0xff] %v2076
      %2132 = vst [vmem:[%s334 + $0x48] sm:$0xff] %v2078
      %2133 = vst [vmem:[%s334 + $0x50] sm:$0xff] %v2080
      %2134 = vst [vmem:[%s334 + $0x58] sm:$0xff] %v2082
      %2135 = vst [vmem:[%s334 + $0x60] sm:$0xff] %v2084
      %2136 = vst [vmem:[%s334 + $0x68] sm:$0xff] %v2086
      %2137 = vst [vmem:[%s334 + $0x70] sm:$0xff] %v2088
      %2138 = vst [vmem:[%s334 + $0x78] sm:$0xff] %v2090
      %2139 = vst [vmem:[%s334 + $0x80] sm:$0xff] %v2092
      %2140 = vst [vmem:[%s334 + $0x88] sm:$0xff] %v2094
      %2141 = vst [vmem:[%s334 + $0x90] sm:$0xff] %v2096
      %2142 = vst [vmem:[%s334 + $0x98] sm:$0xff] %v2098
      %2143 = vst [vmem:[%s334 + $0xa0] sm:$0xff] %v2100
      %2144 = vst [vmem:[%s334 + $0xa8] sm:$0xff] %v2102
      %2145 = vst [vmem:[%s334 + $0xb0] sm:$0xff] %v2104
      %2146 = vst [vmem:[%s334 + $0xb8] sm:$0xff] %v2106
      %2147 = vst [vmem:[%s334 + $0xc0] sm:$0xff] %v2108
      %2148 = vst [vmem:[%s334 + $0xc8] sm:$0xff] %v2110
      %2149 = vst [vmem:[%s334 + $0xd0] sm:$0xff] %v2112
      %2150 = vst [vmem:[%s334 + $0xd8] sm:$0xff] %v2114
      %2151 = vst [vmem:[%s334 + $0xe0] sm:$0xff] %v2116
      %2152 = vst [vmem:[%s334 + $0xe8] sm:$0xff] %v2118
      %2153 = vst [vmem:[%s334 + $0xf0] sm:$0xff] %v2120
      %2154 = vst [vmem:[%s334 + $0xf8] sm:$0xff] %v2122
      %s2155 = smul.u32 32, %s20
      %p2156 = scmp.lt.s32.totalorder %s2155, 63
      %s2157 = scalar_select %p2156, %s2155, 63
      %s2158 = smul.addr %s2157, 8
      %s2159 = scalar_lea.vmem %s9, %s2158
      // Predicated region
      $region57: #{deep_forward.1} parent=55 // pred_check
        %p2160 = pneg %p232
      $region58: #{deep_forward.1} parent=55 // pred_check_branch
        %2162 = sbr.rel (%p2160) target = $region60
      $region59: #{deep_forward.1} parent=55 // pred_region
        %s2163 = smul.u32 32, %s20
      $region60: #{deep_forward.1} parent=55 // pred_fallthru
        _
    $region56: #{deep_forward.1} parent=5 // pred_fallthru
      _
    %p2164 = scmp.le.s32.totalorder 2, %s15
    // Predicated region
    $region61: #{deep_forward.1} parent=5 // pred_check
      %p2165 = pneg %p2164
    $region62: #{deep_forward.1} parent=5 // pred_check_branch
      %2167 = sbr.rel (%p2165) target = $region64
    $region63: #{deep_forward.1} parent=5 // pred_region
      %s2168 = ssub.s32 %s15, 2
      // Predicated region
      $region65: #{deep_forward.1} parent=63 // pred_check
        %p2169 = pneg %p238
      $region66: #{deep_forward.1} parent=63 // pred_check_branch
        %2171 = sbr.rel (%p2169) target = $region68
      $region67: #{deep_forward.1} parent=63 // pred_region
        %s2172 = smul.u32 32, %s21
        %p2173 = scmp.lt.s32.totalorder %s2172, 63
        %s2174 = scalar_select %p2173, %s2172, 63
        %s2175 = smul.addr %s2174, 8
        %s2176 = scalar_lea.vmem %s9, %s2175
      $region68: #{deep_forward.1} parent=63 // pred_fallthru
        _
    $region64: #{deep_forward.1} parent=5 // pred_fallthru
      _
  $region6: #{deep_forward.1} parent=0 // loop_footer
    %s19 = sadd.s32 1, %s15
  $region7: #{deep_forward.1} parent=0 // loop_footer_branch
    %14 = sbr.rel target = $region3
  $region8: #{deep_forward.1} parent=0 // loop_exit
    _

</llo_original>
